<compile_context>
chip_gen: v6e
topology: v6e:2x2x1
jax: 0.10.0
libtpu: 0.0.40
codegen_flags: <defaults>
</compile_context>

<pallas_src>
import functools

import jax
import jax.numpy as jnp
import numpy as np
from jax import lax
from jax.experimental import pallas as pl
from jax.experimental.pallas import tpu as pltpu

NUM_GROUPS = 32
EPS = 1e-6
LANE = 128


def _pick_tile(n, target):
    """Largest divisor of n that is <= target and a multiple of 8, else n (full dim)."""
    if n <= target:
        return n
    for t in range(target, 7, -1):
        if n % t == 0 and t % 8 == 0:
            return t
    return n


# --------------------------------------------------------------------------------------
# Pass 1: GroupNorm statistics: per-(batch, channel) sum and sum-of-squares over N=H*W.
# Grid (B, n_tiles); n_tiles axis is a reduction ("arbitrary") into resident outputs.
# --------------------------------------------------------------------------------------
def _gn_stats_kernel(x_ref, sum_ref, sq_ref):
    @pl.when(pl.program_id(1) == 0)
    def _():
        sum_ref[...] = jnp.zeros(sum_ref.shape, sum_ref.dtype)
        sq_ref[...] = jnp.zeros(sq_ref.shape, sq_ref.dtype)

    x = x_ref[0]                                          # (tn, Cp) f32
    sum_ref[0] += jnp.sum(x, axis=0, keepdims=True)       # (1, Cp)
    sq_ref[0] += jnp.sum(x * x, axis=0, keepdims=True)    # (1, Cp)


# --------------------------------------------------------------------------------------
# Pass 2: fused GroupNorm affine (h = x*scale_c + shift_c) + single QKV projection.
# bf16 MXU operands, f32 accumulation. 1/sqrt(C) is folded into Wq/bq on the host.
# --------------------------------------------------------------------------------------
def _qkv_kernel(x_ref, scl_ref, sft_ref, wqkv_ref, bqkv_ref, q_ref, k_ref, v_ref):
    cp = x_ref.shape[-1]
    h = x_ref[0] * scl_ref[0] + sft_ref[0]                # (tn, Cp) f32
    qkv = jnp.dot(h.astype(jnp.bfloat16), wqkv_ref[...],
                  preferred_element_type=jnp.float32) + bqkv_ref[...]   # (tn, 3Cp) f32
    q_ref[0] = qkv[:, :cp].astype(jnp.bfloat16)
    k_ref[0] = qkv[:, cp:2 * cp].astype(jnp.bfloat16)
    v_ref[0] = qkv[:, 2 * cp:].astype(jnp.bfloat16)


# --------------------------------------------------------------------------------------
# Pass 3: flash-attention over spatial positions + proj_out + residual.
# Grid (B, q_tiles, kv_tiles); kv axis "arbitrary" with running (m, l, acc) in VMEM.
# --------------------------------------------------------------------------------------
def _flash_attn_kernel(x_ref, q_ref, k_ref, v_ref, wp_ref, bp_ref, o_ref,
                       m_sc, l_sc, acc_sc):
    kv = pl.program_id(2)

    @pl.when(kv == 0)
    def _():
        m_sc[...] = jnp.full(m_sc.shape, -jnp.inf, dtype=jnp.float32)
        l_sc[...] = jnp.zeros(l_sc.shape, jnp.float32)
        acc_sc[...] = jnp.zeros(acc_sc.shape, jnp.float32)

    q = q_ref[0]                                          # (tq, Cp) bf16 (pre-scaled)
    k = k_ref[0]                                          # (tk, Cp) bf16
    # Contract over the channel dims of both operands -> no k.T materialization.
    s = lax.dot_general(q, k, (((1,), (1,)), ((), ())),
                        preferred_element_type=jnp.float32)             # (tq, tk) f32

    m_prev = m_sc[...]
    m_new = jnp.maximum(m_prev, jnp.max(s, axis=-1, keepdims=True))     # (tq, 1)
    alpha = jnp.exp(m_prev - m_new)
    p = jnp.exp(s - m_new)                                              # f32
    l_sc[...] = alpha * l_sc[...] + jnp.sum(p, axis=-1, keepdims=True)
    acc_sc[...] = alpha * acc_sc[...] + jnp.dot(
        p.astype(jnp.bfloat16), v_ref[0], preferred_element_type=jnp.float32)
    m_sc[...] = m_new

    @pl.when(kv == pl.num_programs(2) - 1)
    def _():
        # Deferred softmax normalization: one reciprocal per row (EUP), N*C multiplies.
        ho = acc_sc[...] * pl.reciprocal(l_sc[...], approx=True)        # (tq, Cp) f32
        proj = jnp.dot(ho.astype(jnp.bfloat16), wp_ref[...],
                       preferred_element_type=jnp.float32) + bp_ref[...]
        o_ref[0] = x_ref[0] + proj                                      # residual in f32


# --------------------------------------------------------------------------------------
# Wrappers
# --------------------------------------------------------------------------------------
def _attn_block_nhwc(x_nhwc, params):
    B, H, W, C = x_nhwc.shape
    N = H * W
    G = NUM_GROUPS
    gs = C // G
    Cp = ((C + LANE - 1) // LANE) * LANE            # lane-dense channel width
    pad_c = Cp - C

    x = x_nhwc.reshape(B, N, C).astype(jnp.float32)
    if pad_c:
        x = jnp.pad(x, ((0, 0), (0, 0), (0, pad_c)))

    # ---- parameter prep: fold softmax scale into Wq/bq, fuse QKV, pad, cast to bf16 ----
    scale = float(C) ** -0.5

    def padw(w):
        return jnp.pad(w.astype(jnp.float32), ((0, pad_c), (0, pad_c)))

    def padb(b):
        return jnp.pad(b.astype(jnp.float32).reshape(-1), ((0, pad_c),))

    wqkv = jnp.concatenate(
        [padw(params["wq"] * scale), padw(params["wk"]), padw(params["wv"])],
        axis=1).astype(jnp.bfloat16)                              # (Cp, 3Cp) bf16
    bqkv = jnp.concatenate(
        [padb(params["bq"] * scale), padb(params["bk"]), padb(params["bv"])],
        axis=0).reshape(1, 3 * Cp)                                # (1, 3Cp) f32
    wp = padw(params["wp"]).astype(jnp.bfloat16)                  # (Cp, Cp) bf16
    bp = padb(params["bp"]).reshape(1, Cp)                        # (1, Cp)  f32

    # ---- pass 1: GroupNorm statistics ----
    tn = _pick_tile(N, 256)
    nt = N // tn
    sums, sqs = pl.pallas_call(
        _gn_stats_kernel,
        out_shape=(jax.ShapeDtypeStruct((B, 1, Cp), jnp.float32),
                   jax.ShapeDtypeStruct((B, 1, Cp), jnp.float32)),
        grid=(B, nt),
        in_specs=[pl.BlockSpec((1, tn, Cp), lambda b, n: (b, n, 0))],
        out_specs=(pl.BlockSpec((1, 1, Cp), lambda b, n: (b, 0, 0)),
                   pl.BlockSpec((1, 1, Cp), lambda b, n: (b, 0, 0))),
        compiler_params=pltpu.CompilerParams(
            dimension_semantics=("parallel", "arbitrary")),
    )(x)

    # Tiny (B, C) group reduction + affine fold (fuses into the surrounding XLA graph).
    s = sums[:, 0, :C].reshape(B, G, gs).sum(-1)                  # (B, G)
    sq = sqs[:, 0, :C].reshape(B, G, gs).sum(-1)                  # (B, G)
    cnt = jnp.float32(N * gs)
    mean_g = s / cnt
    var_g = jnp.maximum(sq / cnt - mean_g * mean_g, 0.0)          # clamp: cancellation guard
    inv_g = lax.rsqrt(var_g + jnp.float32(EPS))
    mean_c = jnp.repeat(mean_g, gs, axis=1)                       # (B, C)
    inv_c = jnp.repeat(inv_g, gs, axis=1)                         # (B, C)
    gamma = params["gamma"].astype(jnp.float32).reshape(1, C)
    beta = params["beta"].astype(jnp.float32).reshape(1, C)
    scl = inv_c * gamma                                           # (B, C)
    sft = beta - mean_c * scl                                     # (B, C)
    if pad_c:
        scl = jnp.pad(scl, ((0, 0), (0, pad_c)))
        sft = jnp.pad(sft, ((0, 0), (0, pad_c)))
    scl = scl.reshape(B, 1, Cp)
    sft = sft.reshape(B, 1, Cp)

    # ---- pass 2: fused norm-affine + QKV projection (bf16 outputs for the MXU) ----
    q, k, v = pl.pallas_call(
        _qkv_kernel,
        out_shape=(jax.ShapeDtypeStruct((B, N, Cp), jnp.bfloat16),) * 3,
        grid=(B, nt),
        in_specs=[
            pl.BlockSpec((1, tn, Cp), lambda b, n: (b, n, 0)),    # x
            pl.BlockSpec((1, 1, Cp), lambda b, n: (b, 0, 0)),     # scale_c
            pl.BlockSpec((1, 1, Cp), lambda b, n: (b, 0, 0)),     # shift_c
            pl.BlockSpec((Cp, 3 * Cp), lambda b, n: (0, 0)),      # W_qkv
            pl.BlockSpec((1, 3 * Cp), lambda b, n: (0, 0)),       # b_qkv
        ],
        out_specs=(pl.BlockSpec((1, tn, Cp), lambda b, n: (b, n, 0)),) * 3,
        compiler_params=pltpu.CompilerParams(
            dimension_semantics=("parallel", "parallel")),
    )(x, scl, sft, wqkv, bqkv)

    # ---- pass 3: flash attention + proj_out + residual (output aliases x) ----
    tq = _pick_tile(N, 256)
    tk = _pick_tile(N, 512)
    out = pl.pallas_call(
        _flash_attn_kernel,
        out_shape=jax.ShapeDtypeStruct((B, N, Cp), jnp.float32),
        grid=(B, N // tq, N // tk),
        in_specs=[
            pl.BlockSpec((1, tq, Cp), lambda b, i, j: (b, i, 0)),  # x (residual)
            pl.BlockSpec((1, tq, Cp), lambda b, i, j: (b, i, 0)),  # q
            pl.BlockSpec((1, tk, Cp), lambda b, i, j: (b, j, 0)),  # k
            pl.BlockSpec((1, tk, Cp), lambda b, i, j: (b, j, 0)),  # v
            pl.BlockSpec((Cp, Cp), lambda b, i, j: (0, 0)),        # W_proj
            pl.BlockSpec((1, Cp), lambda b, i, j: (0, 0)),         # b_proj
        ],
        out_specs=pl.BlockSpec((1, tq, Cp), lambda b, i, j: (b, i, 0)),
        scratch_shapes=[
            pltpu.VMEM((tq, 1), jnp.float32),    # running max
            pltpu.VMEM((tq, 1), jnp.float32),    # running sum
            pltpu.VMEM((tq, Cp), jnp.float32),   # output accumulator
        ],
        input_output_aliases={0: 0},             # o = x + proj reuses x's buffer
        compiler_params=pltpu.CompilerParams(
            dimension_semantics=("parallel", "parallel", "arbitrary"),
            vmem_limit_bytes=48 * 1024 * 1024),
    )(x, q, k, v, wp, bp)

    if pad_c:
        out = out[:, :, :C]
    return out.reshape(B, H, W, C)


@jax.jit
def attn_block(x_nchw, params):
    """x_nchw: (B, C, H, W) float32 -> (B, C, H, W), matching the PyTorch AttnBlock.

    Weight convention: params["wq"/"wk"/"wv"/"wp"] are (C_in, C_out) matrices, i.e. the
    transpose of the squeezed PyTorch Conv2d 1x1 weights; biases are (C,) vectors.
    """
    x_nhwc = jnp.transpose(x_nchw, (0, 2, 3, 1))
    out = _attn_block_nhwc(x_nhwc, params)
    return jnp.transpose(out, (0, 3, 1, 2))


# --------------------------------------------------------------------------------------
# Pure-JAX f32 reference reproducing the PyTorch forward pass.
# --------------------------------------------------------------------------------------
def attn_block_reference(x_nchw, params):
    B, C, H, W = x_nchw.shape
    G = NUM_GROUPS
    xg = x_nchw.reshape(B, G, C // G, H, W)
    mean = xg.mean(axis=(2, 3, 4), keepdims=True)
    var = xg.var(axis=(2, 3, 4), keepdims=True)
    hn = (xg - mean) / jnp.sqrt(var + EPS)
    hn = hn.reshape(B, C, H, W)
    hn = hn * params["gamma"][None, :, None, None] + params["beta"][None, :, None, None]

    hflat = jnp.transpose(hn, (0, 2, 3, 1)).reshape(B, H * W, C)
    xflat = jnp.transpose(x_nchw, (0, 2, 3, 1)).reshape(B, H * W, C)
    q = hflat @ params["wq"] + params["bq"]
    k = hflat @ params["wk"] + params["bk"]
    v = hflat @ params["wv"] + params["bv"]
    logits = jnp.einsum("bnc,bmc->bnm", q, k) * (C ** -0.5)
    attn = jax.nn.softmax(logits, axis=-1)
    ho = jnp.einsum("bnm,bmc->bnc", attn, v)
    proj = ho @ params["wp"] + params["bp"]
    out = xflat + proj
    return jnp.transpose(out.reshape(B, H, W, C), (0, 3, 1, 2))


def _make_params(key, C):
    keys = jax.random.split(key, 10)
    s = 0.1
    return {
        "gamma": (1.0 + 0.1 * jax.random.normal(keys[0], (C,))).astype(jnp.float32),
        "beta": (0.1 * jax.random.normal(keys[1], (C,))).astype(jnp.float32),
        "wq": (s * jax.random.normal(keys[2], (C, C))).astype(jnp.float32),
        "bq": (s * jax.random.normal(keys[3], (C,))).astype(jnp.float32),
        "wk": (s * jax.random.normal(keys[4], (C, C))).astype(jnp.float32),
        "bk": (s * jax.random.normal(keys[5], (C,))).astype(jnp.float32),
        "wv": (s * jax.random.normal(keys[6], (C, C))).astype(jnp.float32),
        "bv": (s * jax.random.normal(keys[7], (C,))).astype(jnp.float32),
        "wp": (s * jax.random.normal(keys[8], (C, C))).astype(jnp.float32),
        "bp": (s * jax.random.normal(keys[9], (C,))).astype(jnp.float32),
    }


if __name__ == "__main__":
    root = jax.random.PRNGKey(0)

    # Case 1: small shape consistent with the module (GroupNorm needs C % 32 == 0).
    k1, k2, k3, k4 = jax.random.split(root, 4)
    B, C, H, W = 2, 32, 8, 8
    params1 = _make_params(k1, C)
    x1 = jax.random.normal(k2, (B, C, H, W), dtype=jnp.float32)
    out1 = jax.block_until_ready(attn_block(x1, params1))
    ref1 = jax.block_until_ready(attn_block_reference(x1, params1))
    np.testing.assert_allclose(np.asarray(out1), np.asarray(ref1), rtol=2e-2, atol=2e-2)

    # Case 2: exercises multi-tile flash accumulation (N=576 -> several q/kv tiles).
    B2, C2, H2, W2 = 1, 64, 24, 24
    params2 = _make_params(k3, C2)
    x2 = jax.random.normal(k4, (B2, C2, H2, W2), dtype=jnp.float32)
    out2 = jax.block_until_ready(attn_block(x2, params2))
    ref2 = jax.block_until_ready(attn_block_reference(x2, params2))
    np.testing.assert_allclose(np.asarray(out2), np.asarray(ref2), rtol=2e-2, atol=2e-2)

    print("KERNEL_OK")
</pallas_src>

<mosaic_0001>
module attributes {stable_mosaic.version = 11 : i64} {
  func.func @_gn_stats_kernel(%arg0: i32, %arg1: i32, %arg2: memref<1x64x128xf32, #tpu.memory_space<vmem>>, %arg3: memref<1x1x128xf32, #tpu.memory_space<vmem>>, %arg4: memref<1x1x128xf32, #tpu.memory_space<vmem>>) attributes {dimension_semantics = [#tpu.dimension_semantics<parallel>, #tpu.dimension_semantics<arbitrary>], iteration_bounds = array<i64: 2, 1>, scalar_prefetch = 0 : i64, scratch_operands = 0 : i64, tpu.core_type = #tpu.core_type<tc>, window_params = [{transform_indices = @transform_0, window_bounds = array<i64: 1, 64, 128>}, {transform_indices = @transform_1, window_bounds = array<i64: 1, 1, 128>}, {transform_indices = @transform_2, window_bounds = array<i64: 1, 1, 128>}]} {
    %c0_i32 = arith.constant 0 : i32
    %0 = arith.cmpi eq, %arg1, %c0_i32 : i32
    %1 = arith.extui %0 : i1 to i32
    %c0_i32_0 = arith.constant 0 : i32
    %2 = arith.cmpi ne, %1, %c0_i32_0 : i32
    scf.if %2 {
      %cst_16 = arith.constant 0.000000e+00 : f32
      %22 = vector.broadcast %cst_16 : f32 to vector<1x1x128xf32>
      %c0_17 = arith.constant 0 : index
      %c0_18 = arith.constant 0 : index
      %c0_19 = arith.constant 0 : index
      %23 = vector.load %arg3[%c0_17, %c0_18, %c0_19] : memref<1x1x128xf32, #tpu.memory_space<vmem>>, vector<1x1x128xf32>
      tpu.vector_store %arg3[%c0_17, %c0_18, %c0_19], %22 {strides = array<i32>} : memref<1x1x128xf32, #tpu.memory_space<vmem>>, vector<1x1x128xf32>,
      %cst_20 = arith.constant 0.000000e+00 : f32
      %24 = vector.broadcast %cst_20 : f32 to vector<1x1x128xf32>
      %c0_21 = arith.constant 0 : index
      %c0_22 = arith.constant 0 : index
      %c0_23 = arith.constant 0 : index
      %25 = vector.load %arg4[%c0_21, %c0_22, %c0_23] : memref<1x1x128xf32, #tpu.memory_space<vmem>>, vector<1x1x128xf32>
      tpu.vector_store %arg4[%c0_21, %c0_22, %c0_23], %24 {strides = array<i32>} : memref<1x1x128xf32, #tpu.memory_space<vmem>>, vector<1x1x128xf32>,
    } else {
    }
    %c0 = arith.constant 0 : index
    %c0_1 = arith.constant 0 : index
    %c0_2 = arith.constant 0 : index
    %3 = vector.load %arg2[%c0, %c0_1, %c0_2] : memref<1x64x128xf32, #tpu.memory_space<vmem>>, vector<1x64x128xf32>
    %4 = vector.shape_cast %3 : vector<1x64x128xf32> to vector<64x128xf32>
    %c0_3 = arith.constant 0 : index
    %c0_4 = arith.constant 0 : index
    %c0_5 = arith.constant 0 : index
    %5 = vector.load %arg3[%c0_3, %c0_4, %c0_5] : memref<1x1x128xf32, #tpu.memory_space<vmem>>, vector<1x1x128xf32>
    %6 = vector.shape_cast %5 : vector<1x1x128xf32> to vector<1x128xf32>
    %cst = arith.constant dense<0.000000e+00> : vector<128xf32>
    %7 = vector.multi_reduction <add>, %4, %cst [0] : vector<64x128xf32> to vector<128xf32>
    %8 = vector.shape_cast %7 : vector<128xf32> to vector<1x128xf32>
    %9 = arith.addf %6, %8 : vector<1x128xf32>
    %c0_6 = arith.constant 0 : index
    %c0_7 = arith.constant 0 : index
    %c0_8 = arith.constant 0 : index
    %10 = vector.load %arg3[%c0_6, %c0_7, %c0_8] : memref<1x1x128xf32, #tpu.memory_space<vmem>>, vector<1x1x128xf32>
    %11 = vector.shape_cast %10 : vector<1x1x128xf32> to vector<1x128xf32>
    %12 = vector.shape_cast %9 : vector<1x128xf32> to vector<1x1x128xf32>
    tpu.vector_store %arg3[%c0_6, %c0_7, %c0_8], %12 {strides = array<i32>} : memref<1x1x128xf32, #tpu.memory_space<vmem>>, vector<1x1x128xf32>,
    %c0_9 = arith.constant 0 : index
    %c0_10 = arith.constant 0 : index
    %c0_11 = arith.constant 0 : index
    %13 = vector.load %arg4[%c0_9, %c0_10, %c0_11] : memref<1x1x128xf32, #tpu.memory_space<vmem>>, vector<1x1x128xf32>
    %14 = vector.shape_cast %13 : vector<1x1x128xf32> to vector<1x128xf32>
    %15 = arith.mulf %4, %4 : vector<64x128xf32>
    %cst_12 = arith.constant dense<0.000000e+00> : vector<128xf32>
    %16 = vector.multi_reduction <add>, %15, %cst_12 [0] : vector<64x128xf32> to vector<128xf32>
    %17 = vector.shape_cast %16 : vector<128xf32> to vector<1x128xf32>
    %18 = arith.addf %14, %17 : vector<1x128xf32>
    %c0_13 = arith.constant 0 : index
    %c0_14 = arith.constant 0 : index
    %c0_15 = arith.constant 0 : index
    %19 = vector.load %arg4[%c0_13, %c0_14, %c0_15] : memref<1x1x128xf32, #tpu.memory_space<vmem>>, vector<1x1x128xf32>
    %20 = vector.shape_cast %19 : vector<1x1x128xf32> to vector<1x128xf32>
    %21 = vector.shape_cast %18 : vector<1x128xf32> to vector<1x1x128xf32>
    tpu.vector_store %arg4[%c0_13, %c0_14, %c0_15], %21 {strides = array<i32>} : memref<1x1x128xf32, #tpu.memory_space<vmem>>, vector<1x1x128xf32>,
    return
  }
  func.func @transform_0(%arg0: i32, %arg1: i32) -> (i32, i32, i32) {
    %c0_i32 = arith.constant 0 : i32
    %c0_i32_0 = arith.constant 0 : i32
    return %arg0, %arg1, %c0_i32 : i32, i32, i32
  }
  func.func @transform_1(%arg0: i32, %arg1: i32) -> (i32, i32, i32) {
    %c0_i32 = arith.constant 0 : i32
    %c0_i32_0 = arith.constant 0 : i32
    %c0_i32_1 = arith.constant 0 : i32
    return %arg0, %c0_i32, %c0_i32_0 : i32, i32, i32
  }
  func.func @transform_2(%arg0: i32, %arg1: i32) -> (i32, i32, i32) {
    %c0_i32 = arith.constant 0 : i32
    %c0_i32_0 = arith.constant 0 : i32
    %c0_i32_1 = arith.constant 0 : i32
    return %arg0, %c0_i32, %c0_i32_0 : i32, i32, i32
  }
}

module attributes {stable_mosaic.version = 11 : i64} {
  func.func @_qkv_kernel(%arg0: i32, %arg1: i32, %arg2: memref<1x64x128xf32, #tpu.memory_space<vmem>>, %arg3: memref<1x1x128xf32, #tpu.memory_space<vmem>>, %arg4: memref<1x1x128xf32, #tpu.memory_space<vmem>>, %arg5: memref<128x384xbf16, #tpu.memory_space<vmem>>, %arg6: memref<1x384xf32, #tpu.memory_space<vmem>>, %arg7: memref<1x64x128xbf16, #tpu.memory_space<vmem>>, %arg8: memref<1x64x128xbf16, #tpu.memory_space<vmem>>, %arg9: memref<1x64x128xbf16, #tpu.memory_space<vmem>>) attributes {dimension_semantics = [#tpu.dimension_semantics<parallel>, #tpu.dimension_semantics<parallel>], iteration_bounds = array<i64: 2, 1>, scalar_prefetch = 0 : i64, scratch_operands = 0 : i64, tpu.core_type = #tpu.core_type<tc>, window_params = [{transform_indices = @transform_0, window_bounds = array<i64: 1, 64, 128>}, {transform_indices = @transform_1, window_bounds = array<i64: 1, 1, 128>}, {transform_indices = @transform_2, window_bounds = array<i64: 1, 1, 128>}, {pipeline_mode = #tpu.pipeline_mode<synchronous>, transform_indices = @transform_3, window_bounds = array<i64: 128, 384>}, {pipeline_mode = #tpu.pipeline_mode<synchronous>, transform_indices = @transform_4, window_bounds = array<i64: 1, 384>}, {transform_indices = @transform_5, window_bounds = array<i64: 1, 64, 128>}, {transform_indices = @transform_6, window_bounds = array<i64: 1, 64, 128>}, {transform_indices = @transform_7, window_bounds = array<i64: 1, 64, 128>}]} {
    %c0 = arith.constant 0 : index
    %c0_0 = arith.constant 0 : index
    %c0_1 = arith.constant 0 : index
    %0 = vector.load %arg2[%c0, %c0_0, %c0_1] : memref<1x64x128xf32, #tpu.memory_space<vmem>>, vector<1x64x128xf32>
    %1 = vector.shape_cast %0 : vector<1x64x128xf32> to vector<64x128xf32>
    %c0_2 = arith.constant 0 : index
    %c0_3 = arith.constant 0 : index
    %c0_4 = arith.constant 0 : index
    %2 = vector.load %arg3[%c0_2, %c0_3, %c0_4] : memref<1x1x128xf32, #tpu.memory_space<vmem>>, vector<1x1x128xf32>
    %3 = vector.shape_cast %2 : vector<1x1x128xf32> to vector<1x128xf32>
    %4 = vector.broadcast %3 : vector<1x128xf32> to vector<64x128xf32>
    %5 = arith.mulf %1, %4 : vector<64x128xf32>
    %c0_5 = arith.constant 0 : index
    %c0_6 = arith.constant 0 : index
    %c0_7 = arith.constant 0 : index
    %6 = vector.load %arg4[%c0_5, %c0_6, %c0_7] : memref<1x1x128xf32, #tpu.memory_space<vmem>>, vector<1x1x128xf32>
    %7 = vector.shape_cast %6 : vector<1x1x128xf32> to vector<1x128xf32>
    %8 = vector.broadcast %7 : vector<1x128xf32> to vector<64x128xf32>
    %9 = arith.addf %5, %8 : vector<64x128xf32>
    %10 = arith.truncf %9 : vector<64x128xf32> to vector<64x128xbf16>
    %c0_8 = arith.constant 0 : index
    %c0_9 = arith.constant 0 : index
    %11 = vector.load %arg5[%c0_8, %c0_9] : memref<128x384xbf16, #tpu.memory_space<vmem>>, vector<128x384xbf16>
    %cst = arith.constant dense<0.000000e+00> : vector<64x384xf32>
    %12 = tpu.matmul %10, %11, %cst {dimension_numbers = #tpu.dot_dimension_numbers<[1], [0], [0], [1], [0, 0, 1, 1], [], []>} : vector<64x128xbf16>, vector<128x384xbf16>, vector<64x384xf32> -> vector<64x384xf32>
    %c0_10 = arith.constant 0 : index
    %c0_11 = arith.constant 0 : index
    %13 = vector.load %arg6[%c0_10, %c0_11] : memref<1x384xf32, #tpu.memory_space<vmem>>, vector<1x384xf32>
    %14 = vector.broadcast %13 : vector<1x384xf32> to vector<64x384xf32>
    %15 = arith.addf %12, %14 : vector<64x384xf32>
    %16 = vector.extract_strided_slice %15 {offsets = [0, 0], sizes = [64, 128], strides = [1, 1]} : vector<64x384xf32> to vector<64x128xf32>
    %17 = arith.truncf %16 : vector<64x128xf32> to vector<64x128xbf16>
    %c0_12 = arith.constant 0 : index
    %c0_13 = arith.constant 0 : index
    %c0_14 = arith.constant 0 : index
    %18 = vector.load %arg7[%c0_12, %c0_13, %c0_14] : memref<1x64x128xbf16, #tpu.memory_space<vmem>>, vector<1x64x128xbf16>
    %19 = vector.shape_cast %18 : vector<1x64x128xbf16> to vector<64x128xbf16>
    %20 = vector.shape_cast %17 : vector<64x128xbf16> to vector<1x64x128xbf16>
    tpu.vector_store %arg7[%c0_12, %c0_13, %c0_14], %20 {strides = array<i32>} : memref<1x64x128xbf16, #tpu.memory_space<vmem>>, vector<1x64x128xbf16>,
    %21 = vector.extract_strided_slice %15 {offsets = [0, 128], sizes = [64, 128], strides = [1, 1]} : vector<64x384xf32> to vector<64x128xf32>
    %22 = arith.truncf %21 : vector<64x128xf32> to vector<64x128xbf16>
    %c0_15 = arith.constant 0 : index
    %c0_16 = arith.constant 0 : index
    %c0_17 = arith.constant 0 : index
    %23 = vector.load %arg8[%c0_15, %c0_16, %c0_17] : memref<1x64x128xbf16, #tpu.memory_space<vmem>>, vector<1x64x128xbf16>
    %24 = vector.shape_cast %23 : vector<1x64x128xbf16> to vector<64x128xbf16>
    %25 = vector.shape_cast %22 : vector<64x128xbf16> to vector<1x64x128xbf16>
    tpu.vector_store %arg8[%c0_15, %c0_16, %c0_17], %25 {strides = array<i32>} : memref<1x64x128xbf16, #tpu.memory_space<vmem>>, vector<1x64x128xbf16>,
    %26 = vector.extract_strided_slice %15 {offsets = [0, 256], sizes = [64, 128], strides = [1, 1]} : vector<64x384xf32> to vector<64x128xf32>
    %27 = arith.truncf %26 : vector<64x128xf32> to vector<64x128xbf16>
    %c0_18 = arith.constant 0 : index
    %c0_19 = arith.constant 0 : index
    %c0_20 = arith.constant 0 : index
    %28 = vector.load %arg9[%c0_18, %c0_19, %c0_20] : memref<1x64x128xbf16, #tpu.memory_space<vmem>>, vector<1x64x128xbf16>
    %29 = vector.shape_cast %28 : vector<1x64x128xbf16> to vector<64x128xbf16>
    %30 = vector.shape_cast %27 : vector<64x128xbf16> to vector<1x64x128xbf16>
    tpu.vector_store %arg9[%c0_18, %c0_19, %c0_20], %30 {strides = array<i32>} : memref<1x64x128xbf16, #tpu.memory_space<vmem>>, vector<1x64x128xbf16>,
    return
  }
  func.func @transform_0(%arg0: i32, %arg1: i32) -> (i32, i32, i32) {
    %c0_i32 = arith.constant 0 : i32
    %c0_i32_0 = arith.constant 0 : i32
    return %arg0, %arg1, %c0_i32 : i32, i32, i32
  }
  func.func @transform_1(%arg0: i32, %arg1: i32) -> (i32, i32, i32) {
    %c0_i32 = arith.constant 0 : i32
    %c0_i32_0 = arith.constant 0 : i32
    %c0_i32_1 = arith.constant 0 : i32
    return %arg0, %c0_i32, %c0_i32_0 : i32, i32, i32
  }
  func.func @transform_2(%arg0: i32, %arg1: i32) -> (i32, i32, i32) {
    %c0_i32 = arith.constant 0 : i32
    %c0_i32_0 = arith.constant 0 : i32
    %c0_i32_1 = arith.constant 0 : i32
    return %arg0, %c0_i32, %c0_i32_0 : i32, i32, i32
  }
  func.func @transform_3(%arg0: i32, %arg1: i32) -> (i32, i32) {
    %c0_i32 = arith.constant 0 : i32
    %c0_i32_0 = arith.constant 0 : i32
    %c0_i32_1 = arith.constant 0 : i32
    return %c0_i32, %c0_i32_0 : i32, i32
  }
  func.func @transform_4(%arg0: i32, %arg1: i32) -> (i32, i32) {
    %c0_i32 = arith.constant 0 : i32
    %c0_i32_0 = arith.constant 0 : i32
    %c0_i32_1 = arith.constant 0 : i32
    return %c0_i32, %c0_i32_0 : i32, i32
  }
  func.func @transform_5(%arg0: i32, %arg1: i32) -> (i32, i32, i32) {
    %c0_i32 = arith.constant 0 : i32
    %c0_i32_0 = arith.constant 0 : i32
    return %arg0, %arg1, %c0_i32 : i32, i32, i32
  }
  func.func @transform_6(%arg0: i32, %arg1: i32) -> (i32, i32, i32) {
    %c0_i32 = arith.constant 0 : i32
    %c0_i32_0 = arith.constant 0 : i32
    return %arg0, %arg1, %c0_i32 : i32, i32, i32
  }
  func.func @transform_7(%arg0: i32, %arg1: i32) -> (i32, i32, i32) {
    %c0_i32 = arith.constant 0 : i32
    %c0_i32_0 = arith.constant 0 : i32
    return %arg0, %arg1, %c0_i32 : i32, i32, i32
  }
}

module attributes {stable_mosaic.version = 11 : i64} {
  func.func @_flash_attn_kernel(%arg0: i32, %arg1: i32, %arg2: i32, %arg3: memref<1x64x128xf32, #tpu.memory_space<vmem>>, %arg4: memref<1x64x128xbf16, #tpu.memory_space<vmem>>, %arg5: memref<1x64x128xbf16, #tpu.memory_space<vmem>>, %arg6: memref<1x64x128xbf16, #tpu.memory_space<vmem>>, %arg7: memref<128x128xbf16, #tpu.memory_space<vmem>>, %arg8: memref<1x128xf32, #tpu.memory_space<vmem>>, %arg9: memref<1x64x128xf32, #tpu.memory_space<vmem>>, %arg10: memref<64x1xf32, #tpu.memory_space<vmem>>, %arg11: memref<64x1xf32, #tpu.memory_space<vmem>>, %arg12: memref<64x128xf32, #tpu.memory_space<vmem>>) attributes {dimension_semantics = [#tpu.dimension_semantics<parallel>, #tpu.dimension_semantics<parallel>, #tpu.dimension_semantics<arbitrary>], iteration_bounds = array<i64: 2, 1, 1>, scalar_prefetch = 0 : i64, scratch_operands = 3 : i64, tpu.core_type = #tpu.core_type<tc>, window_params = [{transform_indices = @transform_0, window_bounds = array<i64: 1, 64, 128>}, {transform_indices = @transform_1, window_bounds = array<i64: 1, 64, 128>}, {transform_indices = @transform_2, window_bounds = array<i64: 1, 64, 128>}, {transform_indices = @transform_3, window_bounds = array<i64: 1, 64, 128>}, {pipeline_mode = #tpu.pipeline_mode<synchronous>, transform_indices = @transform_4, window_bounds = array<i64: 128, 128>}, {pipeline_mode = #tpu.pipeline_mode<synchronous>, transform_indices = @transform_5, window_bounds = array<i64: 1, 128>}, {transform_indices = @transform_6, window_bounds = array<i64: 1, 64, 128>}]} {
    %c0_i32 = arith.constant 0 : i32
    %0 = arith.cmpi eq, %arg2, %c0_i32 : i32
    %1 = arith.extui %0 : i1 to i32
    %c0_i32_0 = arith.constant 0 : i32
    %2 = arith.cmpi ne, %1, %c0_i32_0 : i32
    scf.if %2 {
      %cst_26 = arith.constant 0xFF800000 : f32
      %36 = vector.broadcast %cst_26 : f32 to vector<64x1xf32>
      %c0_27 = arith.constant 0 : index
      %c0_28 = arith.constant 0 : index
      %37 = vector.load %arg10[%c0_27, %c0_28] : memref<64x1xf32, #tpu.memory_space<vmem>>, vector<64x1xf32>
      tpu.vector_store %arg10[%c0_27, %c0_28], %36 {strides = array<i32>} : memref<64x1xf32, #tpu.memory_space<vmem>>, vector<64x1xf32>,
      %cst_29 = arith.constant 0.000000e+00 : f32
      %38 = vector.broadcast %cst_29 : f32 to vector<64x1xf32>
      %c0_30 = arith.constant 0 : index
      %c0_31 = arith.constant 0 : index
      %39 = vector.load %arg11[%c0_30, %c0_31] : memref<64x1xf32, #tpu.memory_space<vmem>>, vector<64x1xf32>
      tpu.vector_store %arg11[%c0_30, %c0_31], %38 {strides = array<i32>} : memref<64x1xf32, #tpu.memory_space<vmem>>, vector<64x1xf32>,
      %cst_32 = arith.constant 0.000000e+00 : f32
      %40 = vector.broadcast %cst_32 : f32 to vector<64x128xf32>
      %c0_33 = arith.constant 0 : index
      %c0_34 = arith.constant 0 : index
      %41 = vector.load %arg12[%c0_33, %c0_34] : memref<64x128xf32, #tpu.memory_space<vmem>>, vector<64x128xf32>
      tpu.vector_store %arg12[%c0_33, %c0_34], %40 {strides = array<i32>} : memref<64x128xf32, #tpu.memory_space<vmem>>, vector<64x128xf32>,
    } else {
    }
    %c0 = arith.constant 0 : index
    %c0_1 = arith.constant 0 : index
    %c0_2 = arith.constant 0 : index
    %3 = vector.load %arg4[%c0, %c0_1, %c0_2] : memref<1x64x128xbf16, #tpu.memory_space<vmem>>, vector<1x64x128xbf16>
    %4 = vector.shape_cast %3 : vector<1x64x128xbf16> to vector<64x128xbf16>
    %c0_3 = arith.constant 0 : index
    %c0_4 = arith.constant 0 : index
    %c0_5 = arith.constant 0 : index
    %5 = vector.load %arg5[%c0_3, %c0_4, %c0_5] : memref<1x64x128xbf16, #tpu.memory_space<vmem>>, vector<1x64x128xbf16>
    %6 = vector.shape_cast %5 : vector<1x64x128xbf16> to vector<64x128xbf16>
    %cst = arith.constant dense<0.000000e+00> : vector<64x64xf32>
    %7 = tpu.matmul %4, %6, %cst {dimension_numbers = #tpu.dot_dimension_numbers<[1], [1], [0], [0], [0, 0, 1, 0], [], []>} : vector<64x128xbf16>, vector<64x128xbf16>, vector<64x64xf32> -> vector<64x64xf32>
    %c0_6 = arith.constant 0 : index
    %c0_7 = arith.constant 0 : index
    %8 = vector.load %arg10[%c0_6, %c0_7] : memref<64x1xf32, #tpu.memory_space<vmem>>, vector<64x1xf32>
    %cst_8 = arith.constant dense<0xFF800000> : vector<64xf32>
    %9 = vector.multi_reduction <maximumf>, %7, %cst_8 [1] : vector<64x64xf32> to vector<64xf32>
    %10 = vector.shape_cast %9 : vector<64xf32> to vector<64x1xf32>
    %11 = arith.maximumf %8, %10 : vector<64x1xf32>
    %12 = arith.subf %8, %11 : vector<64x1xf32>
    %13 = math.exp %12 : vector<64x1xf32>
    %14 = vector.broadcast %11 : vector<64x1xf32> to vector<64x64xf32>
    %15 = arith.subf %7, %14 : vector<64x64xf32>
    %16 = math.exp %15 : vector<64x64xf32>
    %c0_9 = arith.constant 0 : index
    %c0_10 = arith.constant 0 : index
    %17 = vector.load %arg11[%c0_9, %c0_10] : memref<64x1xf32, #tpu.memory_space<vmem>>, vector<64x1xf32>
    %18 = arith.mulf %13, %17 : vector<64x1xf32>
    %cst_11 = arith.constant dense<0.000000e+00> : vector<64xf32>
    %19 = vector.multi_reduction <add>, %16, %cst_11 [1] : vector<64x64xf32> to vector<64xf32>
    %20 = vector.shape_cast %19 : vector<64xf32> to vector<64x1xf32>
    %21 = arith.addf %18, %20 : vector<64x1xf32>
    %c0_12 = arith.constant 0 : index
    %c0_13 = arith.constant 0 : index
    %22 = vector.load %arg11[%c0_12, %c0_13] : memref<64x1xf32, #tpu.memory_space<vmem>>, vector<64x1xf32>
    tpu.vector_store %arg11[%c0_12, %c0_13], %21 {strides = array<i32>} : memref<64x1xf32, #tpu.memory_space<vmem>>, vector<64x1xf32>,
    %c0_14 = arith.constant 0 : index
    %c0_15 = arith.constant 0 : index
    %23 = vector.load %arg12[%c0_14, %c0_15] : memref<64x128xf32, #tpu.memory_space<vmem>>, vector<64x128xf32>
    %24 = vector.broadcast %13 : vector<64x1xf32> to vector<64x128xf32>
    %25 = arith.mulf %24, %23 : vector<64x128xf32>
    %26 = arith.truncf %16 : vector<64x64xf32> to vector<64x64xbf16>
    %c0_16 = arith.constant 0 : index
    %c0_17 = arith.constant 0 : index
    %c0_18 = arith.constant 0 : index
    %27 = vector.load %arg6[%c0_16, %c0_17, %c0_18] : memref<1x64x128xbf16, #tpu.memory_space<vmem>>, vector<1x64x128xbf16>
    %28 = vector.shape_cast %27 : vector<1x64x128xbf16> to vector<64x128xbf16>
    %cst_19 = arith.constant dense<0.000000e+00> : vector<64x128xf32>
    %29 = tpu.matmul %26, %28, %cst_19 {dimension_numbers = #tpu.dot_dimension_numbers<[1], [0], [0], [1], [0, 0, 1, 1], [], []>} : vector<64x64xbf16>, vector<64x128xbf16>, vector<64x128xf32> -> vector<64x128xf32>
    %30 = arith.addf %25, %29 : vector<64x128xf32>
    %c0_20 = arith.constant 0 : index
    %c0_21 = arith.constant 0 : index
    %31 = vector.load %arg12[%c0_20, %c0_21] : memref<64x128xf32, #tpu.memory_space<vmem>>, vector<64x128xf32>
    tpu.vector_store %arg12[%c0_20, %c0_21], %30 {strides = array<i32>} : memref<64x128xf32, #tpu.memory_space<vmem>>, vector<64x128xf32>,
    %c0_22 = arith.constant 0 : index
    %c0_23 = arith.constant 0 : index
    %32 = vector.load %arg10[%c0_22, %c0_23] : memref<64x1xf32, #tpu.memory_space<vmem>>, vector<64x1xf32>
    tpu.vector_store %arg10[%c0_22, %c0_23], %11 {strides = array<i32>} : memref<64x1xf32, #tpu.memory_space<vmem>>, vector<64x1xf32>,
    %c0_i32_24 = arith.constant 0 : i32
    %33 = arith.cmpi eq, %arg2, %c0_i32_24 : i32
    %34 = arith.extui %33 : i1 to i32
    %c0_i32_25 = arith.constant 0 : i32
    %35 = arith.cmpi ne, %34, %c0_i32_25 : i32
    scf.if %35 {
      %c0_26 = arith.constant 0 : index
      %c0_27 = arith.constant 0 : index
      %36 = vector.load %arg12[%c0_26, %c0_27] : memref<64x128xf32, #tpu.memory_space<vmem>>, vector<64x128xf32>
      %c0_28 = arith.constant 0 : index
      %c0_29 = arith.constant 0 : index
      %37 = vector.load %arg11[%c0_28, %c0_29] : memref<64x1xf32, #tpu.memory_space<vmem>>, vector<64x1xf32>
      %38 = tpu.reciprocal %37 {approx = true} : vector<64x1xf32> -> vector<64x1xf32>
      %39 = vector.broadcast %38 : vector<64x1xf32> to vector<64x128xf32>
      %40 = arith.mulf %36, %39 : vector<64x128xf32>
      %41 = arith.truncf %40 : vector<64x128xf32> to vector<64x128xbf16>
      %c0_30 = arith.constant 0 : index
      %c0_31 = arith.constant 0 : index
      %42 = vector.load %arg7[%c0_30, %c0_31] : memref<128x128xbf16, #tpu.memory_space<vmem>>, vector<128x128xbf16>
      %cst_32 = arith.constant dense<0.000000e+00> : vector<64x128xf32>
      %43 = tpu.matmul %41, %42, %cst_32 {dimension_numbers = #tpu.dot_dimension_numbers<[1], [0], [0], [1], [0, 0, 1, 1], [], []>} : vector<64x128xbf16>, vector<128x128xbf16>, vector<64x128xf32> -> vector<64x128xf32>
      %c0_33 = arith.constant 0 : index
      %c0_34 = arith.constant 0 : index
      %44 = vector.load %arg8[%c0_33, %c0_34] : memref<1x128xf32, #tpu.memory_space<vmem>>, vector<1x128xf32>
      %45 = vector.broadcast %44 : vector<1x128xf32> to vector<64x128xf32>
      %46 = arith.addf %43, %45 : vector<64x128xf32>
      %c0_35 = arith.constant 0 : index
      %c0_36 = arith.constant 0 : index
      %c0_37 = arith.constant 0 : index
      %47 = vector.load %arg3[%c0_35, %c0_36, %c0_37] : memref<1x64x128xf32, #tpu.memory_space<vmem>>, vector<1x64x128xf32>
      %48 = vector.shape_cast %47 : vector<1x64x128xf32> to vector<64x128xf32>
      %49 = arith.addf %48, %46 : vector<64x128xf32>
      %c0_38 = arith.constant 0 : index
      %c0_39 = arith.constant 0 : index
      %c0_40 = arith.constant 0 : index
      %50 = vector.load %arg9[%c0_38, %c0_39, %c0_40] : memref<1x64x128xf32, #tpu.memory_space<vmem>>, vector<1x64x128xf32>
      %51 = vector.shape_cast %50 : vector<1x64x128xf32> to vector<64x128xf32>
      %52 = vector.shape_cast %49 : vector<64x128xf32> to vector<1x64x128xf32>
      tpu.vector_store %arg9[%c0_38, %c0_39, %c0_40], %52 {strides = array<i32>} : memref<1x64x128xf32, #tpu.memory_space<vmem>>, vector<1x64x128xf32>,
    } else {
    }
    return
  }
  func.func @transform_0(%arg0: i32, %arg1: i32, %arg2: i32) -> (i32, i32, i32) {
    %c0_i32 = arith.constant 0 : i32
    %c0_i32_0 = arith.constant 0 : i32
    return %arg0, %arg1, %c0_i32 : i32, i32, i32
  }
  func.func @transform_1(%arg0: i32, %arg1: i32, %arg2: i32) -> (i32, i32, i32) {
    %c0_i32 = arith.constant 0 : i32
    %c0_i32_0 = arith.constant 0 : i32
    return %arg0, %arg1, %c0_i32 : i32, i32, i32
  }
  func.func @transform_2(%arg0: i32, %arg1: i32, %arg2: i32) -> (i32, i32, i32) {
    %c0_i32 = arith.constant 0 : i32
    %c0_i32_0 = arith.constant 0 : i32
    return %arg0, %arg2, %c0_i32 : i32, i32, i32
  }
  func.func @transform_3(%arg0: i32, %arg1: i32, %arg2: i32) -> (i32, i32, i32) {
    %c0_i32 = arith.constant 0 : i32
    %c0_i32_0 = arith.constant 0 : i32
    return %arg0, %arg2, %c0_i32 : i32, i32, i32
  }
  func.func @transform_4(%arg0: i32, %arg1: i32, %arg2: i32) -> (i32, i32) {
    %c0_i32 = arith.constant 0 : i32
    %c0_i32_0 = arith.constant 0 : i32
    %c0_i32_1 = arith.constant 0 : i32
    return %c0_i32, %c0_i32_0 : i32, i32
  }
  func.func @transform_5(%arg0: i32, %arg1: i32, %arg2: i32) -> (i32, i32) {
    %c0_i32 = arith.constant 0 : i32
    %c0_i32_0 = arith.constant 0 : i32
    %c0_i32_1 = arith.constant 0 : i32
    return %c0_i32, %c0_i32_0 : i32, i32
  }
  func.func @transform_6(%arg0: i32, %arg1: i32, %arg2: i32) -> (i32, i32, i32) {
    %c0_i32 = arith.constant 0 : i32
    %c0_i32_0 = arith.constant 0 : i32
    return %arg0, %arg1, %c0_i32 : i32, i32, i32
  }
}

</mosaic_0001>

<llo_original>
// kernel: attn_block.3
$region0: #{attn_block.3}
  #allocation0 [shape = 'u32[]', space=smem, size = 0x4, offset = 0x4, fixed_abs, tag = 'smem constant byte address 0x4 - core index']
  #allocation1 [shape = 'u32[144,128]{1,0:T(1,128)}', space=vmem, size = 0x12000, scoped, tag = 'internal scratch']
  %s0 = inlined_call_operand.vmem [shape: f32[2,64,128], index: 0, kind: input, shape index: {}]
  %s1 = inlined_call_operand.vmem [shape: f32[2,1,128], index: 1, kind: output, shape index: {0}]
  %s2 = inlined_call_operand.vmem [shape: f32[2,1,128], index: 2, kind: output, shape index: {1}]
  %3 = xla_tuple %s1, %s2
  %s4 = sld [smem:[#allocation0]]
  $region49: #{attn_block.3} parent=0
    _
  %s6 = ssub.s32 1, %s4
  %s7 = scalar_select 0, %s6, %s4
  loop: start=0, step=1, limit=4
  $region2: #{attn_block.3} parent=0 // loop_pre_header
    _
  $region3: #{attn_block.3} parent=0 // loop_header
    %s9 = sphi 0, %s13
    %p10 = scmp.ge.s32.totalorder %s9, 4
    %s16 = sphi 0, %s28
    %s17 = sphi 0, %s24
    %s18 = sphi 0, %s16
    %s19 = sphi 0, %s17
    %s20 = sphi 0, %s18
    %s21 = sphi 0, %s19
    %s33 = sphi 0, %s35
    %s36 = sphi 0, %s33
    %s37 = sphi 0, %s36
    %s53 = sphi 0, %s37
    %s59 = sphi 0, %s61
    %s62 = sphi 0, %s59
    %s63 = sphi 0, %s62
    %s79 = sphi 0, %s63
    %s85 = sphi 0, %s87
    %s88 = sphi 0, %s85
    %s89 = sphi 0, %s88
    %s105 = sphi 0, %s89
  $region4: #{attn_block.3} parent=0 // loop_header_branch
    %12 = sbr.rel (%p10) target = $region8
  $region5: #{attn_block.3} parent=0 // loop_body
    %s14 = ssub.s32 %s9, 1
    %s15 = ssub.s32 %s9, 2
    %s22 = sadd.s32 1, %s17
    %p23 = scmp.ge.s32.totalorder %s22, 1
    %s24 = scalar_select %p23, 0, %s22
    %s25 = sadd.s32 1, %s16
    %s26 = scalar_select %p23, %s25, %s16
    %p27 = scmp.ge.s32.totalorder %s26, 2
    %s28 = scalar_select %p27, 0, %s26
    %s29 = ssub.s32 %s16, %s28
    %s30 = ssub.s32 %s17, %s24
    %s31 = sor.u32 %s29, %s30
    %p32 = scmp.eq.s32.totalorder %s31, 0
    %s34 = sadd.s32 %s33, 1
    %s35 = scalar_select %p32, %s33, %s34
    %p38 = pneg %p32
    %p39 = scmp.eq.s32.totalorder %s9, 1
    %p40 = por %p38, %p39
    %p41 = scmp.ne.s32.totalorder %s33, %s36
    %p42 = scmp.eq.s32.totalorder %s9, 0
    %p43 = por %p41, %p42
    %p44 = scmp.ne.s32.totalorder %s33, %s36
    %p45 = scmp.eq.s32.totalorder %s14, 1
    %p46 = por %p44, %p45
    %p47 = scmp.ne.s32.totalorder %s36, %s37
    %p48 = scmp.eq.s32.totalorder %s14, 0
    %p49 = por %p47, %p48
    %p50 = scmp.ne.s32.totalorder %s36, %s37
    %p51 = scmp.eq.s32.totalorder %s15, 1
    %p52 = por %p50, %p51
    %p54 = scmp.ne.s32.totalorder %s37, %s53
    %p55 = scmp.eq.s32.totalorder %s15, 0
    %p56 = por %p54, %p55
    %s57 = ssub.s32 %s16, %s28
    %p58 = scmp.eq.s32.totalorder %s57, 0
    %s60 = sadd.s32 %s59, 1
    %s61 = scalar_select %p58, %s59, %s60
    %p64 = pneg %p58
    %p65 = scmp.eq.s32.totalorder %s9, 1
    %p66 = por %p64, %p65
    %p67 = scmp.ne.s32.totalorder %s59, %s62
    %p68 = scmp.eq.s32.totalorder %s9, 0
    %p69 = por %p67, %p68
    %p70 = scmp.ne.s32.totalorder %s59, %s62
    %p71 = scmp.eq.s32.totalorder %s14, 1
    %p72 = por %p70, %p71
    %p73 = scmp.ne.s32.totalorder %s62, %s63
    %p74 = scmp.eq.s32.totalorder %s14, 0
    %p75 = por %p73, %p74
    %p76 = scmp.ne.s32.totalorder %s62, %s63
    %p77 = scmp.eq.s32.totalorder %s15, 1
    %p78 = por %p76, %p77
    %p80 = scmp.ne.s32.totalorder %s63, %s79
    %p81 = scmp.eq.s32.totalorder %s15, 0
    %p82 = por %p80, %p81
    %s83 = ssub.s32 %s16, %s28
    %p84 = scmp.eq.s32.totalorder %s83, 0
    %s86 = sadd.s32 %s85, 1
    %s87 = scalar_select %p84, %s85, %s86
    %p90 = pneg %p84
    %p91 = scmp.eq.s32.totalorder %s9, 1
    %p92 = por %p90, %p91
    %p93 = scmp.ne.s32.totalorder %s85, %s88
    %p94 = scmp.eq.s32.totalorder %s9, 0
    %p95 = por %p93, %p94
    %p96 = scmp.ne.s32.totalorder %s85, %s88
    %p97 = scmp.eq.s32.totalorder %s14, 1
    %p98 = por %p96, %p97
    %p99 = scmp.ne.s32.totalorder %s88, %s89
    %p100 = scmp.eq.s32.totalorder %s14, 0
    %p101 = por %p99, %p100
    %p102 = scmp.ne.s32.totalorder %s88, %s89
    %p103 = scmp.eq.s32.totalorder %s15, 1
    %p104 = por %p102, %p103
    %p106 = scmp.ne.s32.totalorder %s89, %s105
    %p107 = scmp.eq.s32.totalorder %s15, 0
    %p108 = por %p106, %p107
    %p109 = scmp.le.s32.totalorder 1, %s9
    %p110 = scmp.lt.s32.totalorder %s9, 3
    %p111 = pnand %p109, %p110
    %p112 = pneg %p111
    // Predicated region
    $region9: #{attn_block.3} parent=5 // pred_check
      _
    $region10: #{attn_block.3} parent=5 // pred_check_branch
      %114 = sbr.rel (%p111) target = $region12
    $region11: #{attn_block.3} parent=5 // pred_region
      %s115 = ssub.s32 %s9, 1
    $region12: #{attn_block.3} parent=5 // pred_fallthru
      _
    %p116 = scmp.lt.s32.totalorder %s9, 2
    // Predicated region
    $region13: #{attn_block.3} parent=5 // pred_check
      %p117 = pneg %p116
    $region14: #{attn_block.3} parent=5 // pred_check_branch
      %119 = sbr.rel (%p117) target = $region16
    $region15: #{attn_block.3} parent=5 // pred_region
      // Predicated region
      $region17: #{attn_block.3} parent=15 // pred_check
        %p120 = pneg %p43
      $region18: #{attn_block.3} parent=15 // pred_check_branch
        %122 = sbr.rel (%p120) target = $region20
      $region19: #{attn_block.3} parent=15 // pred_region
        %s123 = smul.u32 8, %s17
        %p124 = scmp.lt.s32.totalorder %s16, 1
        %s125 = scalar_select %p124, %s16, 1
        %p126 = scmp.lt.s32.totalorder %s123, 7
        %s127 = scalar_select %p126, %s123, 7
        %s128 = smul.addr %s125, 8
        %s129 = sadd.s32 %s127, %s128
        %s130 = smul.addr %s129, 8
        %s131 = scalar_lea.vmem %s0, %s130
        %s132 = smul.u32 8, %s17
      $region20: #{attn_block.3} parent=15 // pred_fallthru
        _
    $region16: #{attn_block.3} parent=5 // pred_fallthru
      _
    %p133 = scmp.le.s32.totalorder 1, %s9
    %p134 = scmp.lt.s32.totalorder %s9, 3
    %p135 = pnand %p133, %p134
    %p136 = pneg %p135
    // Predicated region
    $region21: #{attn_block.3} parent=5 // pred_check
      _
    $region22: #{attn_block.3} parent=5 // pred_check_branch
      %138 = sbr.rel (%p135) target = $region24
    $region23: #{attn_block.3} parent=5 // pred_region
      %s139 = ssub.s32 %s9, 1
      %s140 = smul.u32 8, %s19
      %p141 = scmp.lt.s32.totalorder %s18, 1
      %s142 = scalar_select %p141, %s18, 1
      %p143 = scmp.lt.s32.totalorder %s140, 7
      %s144 = scalar_select %p143, %s140, 7
      %s145 = smul.addr %s142, 8
      %s146 = sadd.s32 %s144, %s145
      %s147 = smul.addr %s146, 8
      %s148 = scalar_lea.vmem %s0, %s147
      %p149 = pneg %p49
      %p150 = pneg %p46
      %p151 = pneg %p75
      %p152 = pneg %p72
      %p153 = scmp.lt.s32.totalorder %s18, 1
      %s154 = scalar_select %p153, %s18, 1
      %s155 = scalar_lea.vmem %s1, %s154
      %p156 = pneg %p101
      %p157 = pneg %p98
      %p158 = scmp.lt.s32.totalorder %s18, 1
      %s159 = scalar_select %p158, %s18, 1
      %s160 = scalar_lea.vmem %s2, %s159
      %s161 = smul.u32 8, %s19
      %p162 = scmp.lt.s32.totalorder %s18, 1
      %s163 = scalar_select %p162, %s18, 1
      %p164 = scmp.lt.s32.totalorder %s161, 7
      %s165 = scalar_select %p164, %s161, 7
      %s166 = smul.addr %s163, 8
      %s167 = sadd.s32 %s165, %s166
      %s168 = smul.addr %s167, 8
      %s169 = scalar_lea.vmem %s0, %s168
      %s170 = smul.u32 8, %s19
      %p171 = scmp.lt.s32.totalorder %s18, 1
      %s172 = scalar_select %p171, %s18, 1
      %s173 = scalar_lea.vmem %s1, %s172
      %p174 = scmp.lt.s32.totalorder %s18, 1
      %s175 = scalar_select %p174, %s18, 1
      %s176 = scalar_lea.vmem %s2, %s175
      %p177 = scmp.eq.s32.totalorder %s19, 0
      // Predicated region
      $region25: #{attn_block.3} parent=23 // pred_check
        %p178 = pneg %p177
      $region26: #{attn_block.3} parent=23 // pred_check_branch
        %180 = sbr.rel (%p178) target = $region28
      $region27: #{attn_block.3} parent=23 // pred_region
        %181 = vst [vmem:[%s173] sm:$0x1] 0.0
        %182 = vst [vmem:[%s176] sm:$0x1] 0.0
      $region28: #{attn_block.3} parent=23 // pred_fallthru
        _
      %v183 = vld [vmem:[%s169] sm:$0xff]
      %v184 = vld [vmem:[%s169 + $0x8] sm:$0xff]
      %v185 = vld [vmem:[%s169 + $0x10] sm:$0xff]
      %v186 = vld [vmem:[%s169 + $0x18] sm:$0xff]
      %v187 = vld [vmem:[%s169 + $0x20] sm:$0xff]
      %v188 = vld [vmem:[%s169 + $0x28] sm:$0xff]
      %v189 = vld [vmem:[%s169 + $0x30] sm:$0xff]
      %v190 = vld [vmem:[%s169 + $0x38] sm:$0xff]
      %v191 = vld [vmem:[%s173] sm:$0x1]
      %v192 = vadd.f32 %v183, %v184
      %v193 = vadd.f32 %v192, %v185
      %v194 = vadd.f32 %v193, %v186
      %v195 = vadd.f32 %v194, %v187
      %v196 = vadd.f32 %v195, %v188
      %v197 = vadd.f32 %v196, %v189
      %v198 = vadd.f32 %v197, %v190
      %v199 = vrot.slane %v198, 4
      %v200 = vadd.f32 %v198, %v199
      %v201 = vrot.slane %v200, 2
      %v202 = vadd.f32 %v200, %v201
      %v203 = vrot.slane %v202, 1
      %v204 = vadd.f32 %v202, %v203
      %v205 = vadd.f32 %v191, %v204
      %206 = vst [vmem:[%s173] sm:$0x1] %v205
      %v207 = vld [vmem:[%s176] sm:$0x1]
      %v208 = vmul.f32 %v183, %v183
      %v209 = vmul.f32 %v184, %v184
      %v210 = vmul.f32 %v185, %v185
      %v211 = vmul.f32 %v186, %v186
      %v212 = vmul.f32 %v187, %v187
      %v213 = vmul.f32 %v188, %v188
      %v214 = vmul.f32 %v189, %v189
      %v215 = vmul.f32 %v190, %v190
      %v216 = vadd.f32 %v208, %v209
      %v217 = vadd.f32 %v216, %v210
      %v218 = vadd.f32 %v217, %v211
      %v219 = vadd.f32 %v218, %v212
      %v220 = vadd.f32 %v219, %v213
      %v221 = vadd.f32 %v220, %v214
      %v222 = vadd.f32 %v221, %v215
      %v223 = vrot.slane %v222, 4
      %v224 = vadd.f32 %v222, %v223
      %v225 = vrot.slane %v224, 2
      %v226 = vadd.f32 %v224, %v225
      %v227 = vrot.slane %v226, 1
      %v228 = vadd.f32 %v226, %v227
      %v229 = vadd.f32 %v207, %v228
      %230 = vst [vmem:[%s176] sm:$0x1] %v229
      %p231 = scmp.lt.s32.totalorder %s18, 1
      %s232 = scalar_select %p231, %s18, 1
      %s233 = scalar_lea.vmem %s1, %s232
      %p234 = scmp.lt.s32.totalorder %s18, 1
      %s235 = scalar_select %p234, %s18, 1
      %s236 = scalar_lea.vmem %s2, %s235
      // Predicated region
      $region29: #{attn_block.3} parent=23 // pred_check
        %p237 = pneg %p72
      $region30: #{attn_block.3} parent=23 // pred_check_branch
        %239 = sbr.rel (%p237) target = $region32
      $region31: #{attn_block.3} parent=23 // pred_region
        _
      $region32: #{attn_block.3} parent=23 // pred_fallthru
        _
      // Predicated region
      $region33: #{attn_block.3} parent=23 // pred_check
        %p240 = pneg %p98
      $region34: #{attn_block.3} parent=23 // pred_check_branch
        %242 = sbr.rel (%p240) target = $region36
      $region35: #{attn_block.3} parent=23 // pred_region
        _
      $region36: #{attn_block.3} parent=23 // pred_fallthru
        _
    $region24: #{attn_block.3} parent=5 // pred_fallthru
      _
    %p243 = scmp.le.s32.totalorder 2, %s9
    // Predicated region
    $region37: #{attn_block.3} parent=5 // pred_check
      %p244 = pneg %p243
    $region38: #{attn_block.3} parent=5 // pred_check_branch
      %246 = sbr.rel (%p244) target = $region40
    $region39: #{attn_block.3} parent=5 // pred_region
      %s247 = ssub.s32 %s9, 2
      // Predicated region
      $region41: #{attn_block.3} parent=39 // pred_check
        %p248 = pneg %p78
      $region42: #{attn_block.3} parent=39 // pred_check_branch
        %250 = sbr.rel (%p248) target = $region44
      $region43: #{attn_block.3} parent=39 // pred_region
        %p251 = scmp.lt.s32.totalorder %s20, 1
        %s252 = scalar_select %p251, %s20, 1
        %s253 = scalar_lea.vmem %s1, %s252
      $region44: #{attn_block.3} parent=39 // pred_fallthru
        _
      // Predicated region
      $region45: #{attn_block.3} parent=39 // pred_check
        %p254 = pneg %p104
      $region46: #{attn_block.3} parent=39 // pred_check_branch
        %256 = sbr.rel (%p254) target = $region48
      $region47: #{attn_block.3} parent=39 // pred_region
        %p257 = scmp.lt.s32.totalorder %s20, 1
        %s258 = scalar_select %p257, %s20, 1
        %s259 = scalar_lea.vmem %s2, %s258
      $region48: #{attn_block.3} parent=39 // pred_fallthru
        _
    $region40: #{attn_block.3} parent=5 // pred_fallthru
      _
  $region6: #{attn_block.3} parent=0 // loop_footer
    %s13 = sadd.s32 1, %s9
  $region7: #{attn_block.3} parent=0 // loop_footer_branch
    %8 = sbr.rel target = $region3
  $region8: #{attn_block.3} parent=0 // loop_exit
    _

// kernel: attn_block.4
$region0: #{attn_block.4}
  #allocation0 [shape = 'u32[]', space=smem, size = 0x4, offset = 0x4, fixed_abs, tag = 'smem constant byte address 0x4 - core index']
  #allocation1 [shape = 'u32[144,128]{1,0:T(1,128)}', space=vmem, size = 0x12000, scoped, tag = 'internal scratch']
  %s0 = inlined_call_operand.vmem [shape: f32[2,64,128], index: 0, kind: input, shape index: {}]
  %s1 = inlined_call_operand.vmem [shape: f32[2,1,128], index: 1, kind: input, shape index: {}]
  %s2 = inlined_call_operand.vmem [shape: f32[2,1,128], index: 2, kind: input, shape index: {}]
  %s3 = inlined_call_operand.vmem [shape: bf16[128,384], index: 3, kind: input, shape index: {}]
  %s4 = inlined_call_operand.vmem [shape: f32[1,384], index: 4, kind: input, shape index: {}]
  %s5 = inlined_call_operand.vmem [shape: bf16[2,64,128], index: 5, kind: output, shape index: {0}]
  %s6 = inlined_call_operand.vmem [shape: bf16[2,64,128], index: 6, kind: output, shape index: {1}]
  %s7 = inlined_call_operand.vmem [shape: bf16[2,64,128], index: 7, kind: output, shape index: {2}]
  %8 = xla_tuple %s5, %s6, %s7
  %s9 = sld [smem:[#allocation0]]
  $region69: #{attn_block.4} parent=0
    _
  %s11 = ssub.s32 1, %s9
  %s12 = scalar_select 0, %s11, %s9
  loop: start=0, step=1, limit=4
  $region2: #{attn_block.4} parent=0 // loop_pre_header
    _
  $region3: #{attn_block.4} parent=0 // loop_header
    %s14 = sphi 0, %s18
    %p15 = scmp.ge.s32.totalorder %s14, 4
    %s21 = sphi 0, %s33
    %s22 = sphi 0, %s29
    %s23 = sphi 0, %s21
    %s24 = sphi 0, %s22
    %s25 = sphi 0, %s23
    %s26 = sphi 0, %s24
    %s38 = sphi 0, %s40
    %s41 = sphi 0, %s38
    %s42 = sphi 0, %s41
    %s58 = sphi 0, %s42
    %s64 = sphi 0, %s66
    %s67 = sphi 0, %s64
    %s68 = sphi 0, %s67
    %s84 = sphi 0, %s68
    %s90 = sphi 0, %s92
    %s93 = sphi 0, %s90
    %s94 = sphi 0, %s93
    %s110 = sphi 0, %s94
    %s114 = sphi 0, %s114
    %s116 = sphi 0, %s114
    %s117 = sphi 0, %s116
    %s131 = sphi 0, %s117
    %s135 = sphi 0, %s135
    %s137 = sphi 0, %s135
    %s138 = sphi 0, %s137
    %s152 = sphi 0, %s138
    %s160 = sphi 0, %s162
    %s163 = sphi 0, %s160
    %s164 = sphi 0, %s163
    %s180 = sphi 0, %s164
    %s188 = sphi 0, %s190
    %s191 = sphi 0, %s188
    %s192 = sphi 0, %s191
    %s208 = sphi 0, %s192
    %s216 = sphi 0, %s218
    %s219 = sphi 0, %s216
    %s220 = sphi 0, %s219
    %s236 = sphi 0, %s220
  $region4: #{attn_block.4} parent=0 // loop_header_branch
    %17 = sbr.rel (%p15) target = $region8
  $region5: #{attn_block.4} parent=0 // loop_body
    %s19 = ssub.s32 %s14, 1
    %s20 = ssub.s32 %s14, 2
    %s27 = sadd.s32 1, %s22
    %p28 = scmp.ge.s32.totalorder %s27, 1
    %s29 = scalar_select %p28, 0, %s27
    %s30 = sadd.s32 1, %s21
    %s31 = scalar_select %p28, %s30, %s21
    %p32 = scmp.ge.s32.totalorder %s31, 2
    %s33 = scalar_select %p32, 0, %s31
    %s34 = ssub.s32 %s21, %s33
    %s35 = ssub.s32 %s22, %s29
    %s36 = sor.u32 %s34, %s35
    %p37 = scmp.eq.s32.totalorder %s36, 0
    %s39 = sadd.s32 %s38, 1
    %s40 = scalar_select %p37, %s38, %s39
    %p43 = pneg %p37
    %p44 = scmp.eq.s32.totalorder %s14, 1
    %p45 = por %p43, %p44
    %p46 = scmp.ne.s32.totalorder %s38, %s41
    %p47 = scmp.eq.s32.totalorder %s14, 0
    %p48 = por %p46, %p47
    %p49 = scmp.ne.s32.totalorder %s38, %s41
    %p50 = scmp.eq.s32.totalorder %s19, 1
    %p51 = por %p49, %p50
    %p52 = scmp.ne.s32.totalorder %s41, %s42
    %p53 = scmp.eq.s32.totalorder %s19, 0
    %p54 = por %p52, %p53
    %p55 = scmp.ne.s32.totalorder %s41, %s42
    %p56 = scmp.eq.s32.totalorder %s20, 1
    %p57 = por %p55, %p56
    %p59 = scmp.ne.s32.totalorder %s42, %s58
    %p60 = scmp.eq.s32.totalorder %s20, 0
    %p61 = por %p59, %p60
    %s62 = ssub.s32 %s21, %s33
    %p63 = scmp.eq.s32.totalorder %s62, 0
    %s65 = sadd.s32 %s64, 1
    %s66 = scalar_select %p63, %s64, %s65
    %p69 = pneg %p63
    %p70 = scmp.eq.s32.totalorder %s14, 1
    %p71 = por %p69, %p70
    %p72 = scmp.ne.s32.totalorder %s64, %s67
    %p73 = scmp.eq.s32.totalorder %s14, 0
    %p74 = por %p72, %p73
    %p75 = scmp.ne.s32.totalorder %s64, %s67
    %p76 = scmp.eq.s32.totalorder %s19, 1
    %p77 = por %p75, %p76
    %p78 = scmp.ne.s32.totalorder %s67, %s68
    %p79 = scmp.eq.s32.totalorder %s19, 0
    %p80 = por %p78, %p79
    %p81 = scmp.ne.s32.totalorder %s67, %s68
    %p82 = scmp.eq.s32.totalorder %s20, 1
    %p83 = por %p81, %p82
    %p85 = scmp.ne.s32.totalorder %s68, %s84
    %p86 = scmp.eq.s32.totalorder %s20, 0
    %p87 = por %p85, %p86
    %s88 = ssub.s32 %s21, %s33
    %p89 = scmp.eq.s32.totalorder %s88, 0
    %s91 = sadd.s32 %s90, 1
    %s92 = scalar_select %p89, %s90, %s91
    %p95 = pneg %p89
    %p96 = scmp.eq.s32.totalorder %s14, 1
    %p97 = por %p95, %p96
    %p98 = scmp.ne.s32.totalorder %s90, %s93
    %p99 = scmp.eq.s32.totalorder %s14, 0
    %p100 = por %p98, %p99
    %p101 = scmp.ne.s32.totalorder %s90, %s93
    %p102 = scmp.eq.s32.totalorder %s19, 1
    %p103 = por %p101, %p102
    %p104 = scmp.ne.s32.totalorder %s93, %s94
    %p105 = scmp.eq.s32.totalorder %s19, 0
    %p106 = por %p104, %p105
    %p107 = scmp.ne.s32.totalorder %s93, %s94
    %p108 = scmp.eq.s32.totalorder %s20, 1
    %p109 = por %p107, %p108
    %p111 = scmp.ne.s32.totalorder %s94, %s110
    %p112 = scmp.eq.s32.totalorder %s20, 0
    %p113 = por %p111, %p112
    %s115 = sadd.s32 %s114, 1
    %p118 = scmp.eq.s32.totalorder %s14, 1
    %p119 = scmp.ne.s32.totalorder %s114, %s116
    %p120 = scmp.eq.s32.totalorder %s14, 0
    %p121 = por %p119, %p120
    %p122 = scmp.ne.s32.totalorder %s114, %s116
    %p123 = scmp.eq.s32.totalorder %s19, 1
    %p124 = por %p122, %p123
    %p125 = scmp.ne.s32.totalorder %s116, %s117
    %p126 = scmp.eq.s32.totalorder %s19, 0
    %p127 = por %p125, %p126
    %p128 = scmp.ne.s32.totalorder %s116, %s117
    %p129 = scmp.eq.s32.totalorder %s20, 1
    %p130 = por %p128, %p129
    %p132 = scmp.ne.s32.totalorder %s117, %s131
    %p133 = scmp.eq.s32.totalorder %s20, 0
    %p134 = por %p132, %p133
    %s136 = sadd.s32 %s135, 1
    %p139 = scmp.eq.s32.totalorder %s14, 1
    %p140 = scmp.ne.s32.totalorder %s135, %s137
    %p141 = scmp.eq.s32.totalorder %s14, 0
    %p142 = por %p140, %p141
    %p143 = scmp.ne.s32.totalorder %s135, %s137
    %p144 = scmp.eq.s32.totalorder %s19, 1
    %p145 = por %p143, %p144
    %p146 = scmp.ne.s32.totalorder %s137, %s138
    %p147 = scmp.eq.s32.totalorder %s19, 0
    %p148 = por %p146, %p147
    %p149 = scmp.ne.s32.totalorder %s137, %s138
    %p150 = scmp.eq.s32.totalorder %s20, 1
    %p151 = por %p149, %p150
    %p153 = scmp.ne.s32.totalorder %s138, %s152
    %p154 = scmp.eq.s32.totalorder %s20, 0
    %p155 = por %p153, %p154
    %s156 = ssub.s32 %s21, %s33
    %s157 = ssub.s32 %s22, %s29
    %s158 = sor.u32 %s156, %s157
    %p159 = scmp.eq.s32.totalorder %s158, 0
    %s161 = sadd.s32 %s160, 1
    %s162 = scalar_select %p159, %s160, %s161
    %p165 = pneg %p159
    %p166 = scmp.eq.s32.totalorder %s14, 1
    %p167 = por %p165, %p166
    %p168 = scmp.ne.s32.totalorder %s160, %s163
    %p169 = scmp.eq.s32.totalorder %s14, 0
    %p170 = por %p168, %p169
    %p171 = scmp.ne.s32.totalorder %s160, %s163
    %p172 = scmp.eq.s32.totalorder %s19, 1
    %p173 = por %p171, %p172
    %p174 = scmp.ne.s32.totalorder %s163, %s164
    %p175 = scmp.eq.s32.totalorder %s19, 0
    %p176 = por %p174, %p175
    %p177 = scmp.ne.s32.totalorder %s163, %s164
    %p178 = scmp.eq.s32.totalorder %s20, 1
    %p179 = por %p177, %p178
    %p181 = scmp.ne.s32.totalorder %s164, %s180
    %p182 = scmp.eq.s32.totalorder %s20, 0
    %p183 = por %p181, %p182
    %s184 = ssub.s32 %s21, %s33
    %s185 = ssub.s32 %s22, %s29
    %s186 = sor.u32 %s184, %s185
    %p187 = scmp.eq.s32.totalorder %s186, 0
    %s189 = sadd.s32 %s188, 1
    %s190 = scalar_select %p187, %s188, %s189
    %p193 = pneg %p187
    %p194 = scmp.eq.s32.totalorder %s14, 1
    %p195 = por %p193, %p194
    %p196 = scmp.ne.s32.totalorder %s188, %s191
    %p197 = scmp.eq.s32.totalorder %s14, 0
    %p198 = por %p196, %p197
    %p199 = scmp.ne.s32.totalorder %s188, %s191
    %p200 = scmp.eq.s32.totalorder %s19, 1
    %p201 = por %p199, %p200
    %p202 = scmp.ne.s32.totalorder %s191, %s192
    %p203 = scmp.eq.s32.totalorder %s19, 0
    %p204 = por %p202, %p203
    %p205 = scmp.ne.s32.totalorder %s191, %s192
    %p206 = scmp.eq.s32.totalorder %s20, 1
    %p207 = por %p205, %p206
    %p209 = scmp.ne.s32.totalorder %s192, %s208
    %p210 = scmp.eq.s32.totalorder %s20, 0
    %p211 = por %p209, %p210
    %s212 = ssub.s32 %s21, %s33
    %s213 = ssub.s32 %s22, %s29
    %s214 = sor.u32 %s212, %s213
    %p215 = scmp.eq.s32.totalorder %s214, 0
    %s217 = sadd.s32 %s216, 1
    %s218 = scalar_select %p215, %s216, %s217
    %p221 = pneg %p215
    %p222 = scmp.eq.s32.totalorder %s14, 1
    %p223 = por %p221, %p222
    %p224 = scmp.ne.s32.totalorder %s216, %s219
    %p225 = scmp.eq.s32.totalorder %s14, 0
    %p226 = por %p224, %p225
    %p227 = scmp.ne.s32.totalorder %s216, %s219
    %p228 = scmp.eq.s32.totalorder %s19, 1
    %p229 = por %p227, %p228
    %p230 = scmp.ne.s32.totalorder %s219, %s220
    %p231 = scmp.eq.s32.totalorder %s19, 0
    %p232 = por %p230, %p231
    %p233 = scmp.ne.s32.totalorder %s219, %s220
    %p234 = scmp.eq.s32.totalorder %s20, 1
    %p235 = por %p233, %p234
    %p237 = scmp.ne.s32.totalorder %s220, %s236
    %p238 = scmp.eq.s32.totalorder %s20, 0
    %p239 = por %p237, %p238
    %p240 = scmp.le.s32.totalorder 1, %s14
    %p241 = scmp.lt.s32.totalorder %s14, 3
    %p242 = pnand %p240, %p241
    %p243 = pneg %p242
    // Predicated region
    $region9: #{attn_block.4} parent=5 // pred_check
      _
    $region10: #{attn_block.4} parent=5 // pred_check_branch
      %245 = sbr.rel (%p242) target = $region12
    $region11: #{attn_block.4} parent=5 // pred_region
      %s246 = ssub.s32 %s14, 1
      // Predicated region
      $region13: #{attn_block.4} parent=11 // pred_check
        %p247 = pneg %p127
      $region14: #{attn_block.4} parent=11 // pred_check_branch
        %249 = sbr.rel (%p247) target = $region16
      $region15: #{attn_block.4} parent=11 // pred_region
        _
      $region16: #{attn_block.4} parent=11 // pred_fallthru
        _
      // Predicated region
      $region17: #{attn_block.4} parent=11 // pred_check
        %p250 = pneg %p148
      $region18: #{attn_block.4} parent=11 // pred_check_branch
        %252 = sbr.rel (%p250) target = $region20
      $region19: #{attn_block.4} parent=11 // pred_region
        _
      $region20: #{attn_block.4} parent=11 // pred_fallthru
        _
    $region12: #{attn_block.4} parent=5 // pred_fallthru
      _
    %p253 = scmp.lt.s32.totalorder %s14, 2
    // Predicated region
    $region21: #{attn_block.4} parent=5 // pred_check
      %p254 = pneg %p253
    $region22: #{attn_block.4} parent=5 // pred_check_branch
      %256 = sbr.rel (%p254) target = $region24
    $region23: #{attn_block.4} parent=5 // pred_region
      // Predicated region
      $region25: #{attn_block.4} parent=23 // pred_check
        %p257 = pneg %p48
      $region26: #{attn_block.4} parent=23 // pred_check_branch
        %259 = sbr.rel (%p257) target = $region28
      $region27: #{attn_block.4} parent=23 // pred_region
        %s260 = smul.u32 8, %s22
        %p261 = scmp.lt.s32.totalorder %s21, 1
        %s262 = scalar_select %p261, %s21, 1
        %p263 = scmp.lt.s32.totalorder %s260, 7
        %s264 = scalar_select %p263, %s260, 7
        %s265 = smul.addr %s262, 8
        %s266 = sadd.s32 %s264, %s265
        %s267 = smul.addr %s266, 8
        %s268 = scalar_lea.vmem %s0, %s267
        %s269 = smul.u32 8, %s22
      $region28: #{attn_block.4} parent=23 // pred_fallthru
        _
      // Predicated region
      $region29: #{attn_block.4} parent=23 // pred_check
        %p270 = pneg %p74
      $region30: #{attn_block.4} parent=23 // pred_check_branch
        %272 = sbr.rel (%p270) target = $region32
      $region31: #{attn_block.4} parent=23 // pred_region
        %p273 = scmp.lt.s32.totalorder %s21, 1
        %s274 = scalar_select %p273, %s21, 1
        %s275 = scalar_lea.vmem %s1, %s274
      $region32: #{attn_block.4} parent=23 // pred_fallthru
        _
      // Predicated region
      $region33: #{attn_block.4} parent=23 // pred_check
        %p276 = pneg %p100
      $region34: #{attn_block.4} parent=23 // pred_check_branch
        %278 = sbr.rel (%p276) target = $region36
      $region35: #{attn_block.4} parent=23 // pred_region
        %p279 = scmp.lt.s32.totalorder %s21, 1
        %s280 = scalar_select %p279, %s21, 1
        %s281 = scalar_lea.vmem %s2, %s280
      $region36: #{attn_block.4} parent=23 // pred_fallthru
        _
    $region24: #{attn_block.4} parent=5 // pred_fallthru
      _
    %p282 = scmp.le.s32.totalorder 1, %s14
    %p283 = scmp.lt.s32.totalorder %s14, 3
    %p284 = pnand %p282, %p283
    %p285 = pneg %p284
    // Predicated region
    $region37: #{attn_block.4} parent=5 // pred_check
      _
    $region38: #{attn_block.4} parent=5 // pred_check_branch
      %287 = sbr.rel (%p284) target = $region40
    $region39: #{attn_block.4} parent=5 // pred_region
      %s288 = ssub.s32 %s14, 1
      %s289 = smul.u32 8, %s24
      %p290 = scmp.lt.s32.totalorder %s23, 1
      %s291 = scalar_select %p290, %s23, 1
      %p292 = scmp.lt.s32.totalorder %s289, 7
      %s293 = scalar_select %p292, %s289, 7
      %s294 = smul.addr %s291, 8
      %s295 = sadd.s32 %s293, %s294
      %s296 = smul.addr %s295, 8
      %s297 = scalar_lea.vmem %s0, %s296
      %p298 = pneg %p54
      %p299 = pneg %p51
      %p300 = scmp.lt.s32.totalorder %s23, 1
      %s301 = scalar_select %p300, %s23, 1
      %s302 = scalar_lea.vmem %s1, %s301
      %p303 = pneg %p80
      %p304 = pneg %p77
      %p305 = scmp.lt.s32.totalorder %s23, 1
      %s306 = scalar_select %p305, %s23, 1
      %s307 = scalar_lea.vmem %s2, %s306
      %p308 = pneg %p106
      %p309 = pneg %p103
      %p310 = pneg %p127
      %p311 = pneg %p124
      %p312 = pneg %p148
      %p313 = pneg %p145
      %p314 = pneg %p176
      %p315 = pneg %p173
      %s316 = smul.u32 8, %s24
      %p317 = scmp.lt.s32.totalorder %s23, 1
      %s318 = scalar_select %p317, %s23, 1
      %p319 = scmp.lt.s32.totalorder %s316, 7
      %s320 = scalar_select %p319, %s316, 7
      %s321 = smul.addr %s318, 8
      %s322 = sadd.s32 %s320, %s321
      %s323 = smul.addr %s322, 4
      %s324 = scalar_lea.vmem %s5, %s323
      %p325 = pneg %p204
      %p326 = pneg %p201
      %s327 = smul.u32 8, %s24
      %p328 = scmp.lt.s32.totalorder %s23, 1
      %s329 = scalar_select %p328, %s23, 1
      %p330 = scmp.lt.s32.totalorder %s327, 7
      %s331 = scalar_select %p330, %s327, 7
      %s332 = smul.addr %s329, 8
      %s333 = sadd.s32 %s331, %s332
      %s334 = smul.addr %s333, 4
      %s335 = scalar_lea.vmem %s6, %s334
      %p336 = pneg %p232
      %p337 = pneg %p229
      %s338 = smul.u32 8, %s24
      %p339 = scmp.lt.s32.totalorder %s23, 1
      %s340 = scalar_select %p339, %s23, 1
      %p341 = scmp.lt.s32.totalorder %s338, 7
      %s342 = scalar_select %p341, %s338, 7
      %s343 = smul.addr %s340, 8
      %s344 = sadd.s32 %s342, %s343
      %s345 = smul.addr %s344, 4
      %s346 = scalar_lea.vmem %s7, %s345
      %s347 = smul.u32 8, %s24
      %p348 = scmp.lt.s32.totalorder %s23, 1
      %s349 = scalar_select %p348, %s23, 1
      %p350 = scmp.lt.s32.totalorder %s347, 7
      %s351 = scalar_select %p350, %s347, 7
      %s352 = smul.addr %s349, 8
      %s353 = sadd.s32 %s351, %s352
      %s354 = smul.addr %s353, 8
      %s355 = scalar_lea.vmem %s0, %s354
      %s356 = smul.u32 8, %s24
      %p357 = scmp.lt.s32.totalorder %s23, 1
      %s358 = scalar_select %p357, %s23, 1
      %s359 = scalar_lea.vmem %s1, %s358
      %p360 = scmp.lt.s32.totalorder %s23, 1
      %s361 = scalar_select %p360, %s23, 1
      %s362 = scalar_lea.vmem %s2, %s361
      %s363 = smul.u32 8, %s24
      %p364 = scmp.lt.s32.totalorder %s23, 1
      %s365 = scalar_select %p364, %s23, 1
      %p366 = scmp.lt.s32.totalorder %s363, 7
      %s367 = scalar_select %p366, %s363, 7
      %s368 = smul.addr %s365, 8
      %s369 = sadd.s32 %s367, %s368
      %s370 = smul.addr %s369, 4
      %s371 = scalar_lea.vmem %s5, %s370
      %s372 = smul.u32 8, %s24
      %s373 = smul.u32 8, %s24
      %p374 = scmp.lt.s32.totalorder %s23, 1
      %s375 = scalar_select %p374, %s23, 1
      %p376 = scmp.lt.s32.totalorder %s373, 7
      %s377 = scalar_select %p376, %s373, 7
      %s378 = smul.addr %s375, 8
      %s379 = sadd.s32 %s377, %s378
      %s380 = smul.addr %s379, 4
      %s381 = scalar_lea.vmem %s6, %s380
      %s382 = smul.u32 8, %s24
      %s383 = smul.u32 8, %s24
      %p384 = scmp.lt.s32.totalorder %s23, 1
      %s385 = scalar_select %p384, %s23, 1
      %p386 = scmp.lt.s32.totalorder %s383, 7
      %s387 = scalar_select %p386, %s383, 7
      %s388 = smul.addr %s385, 8
      %s389 = sadd.s32 %s387, %s388
      %s390 = smul.addr %s389, 4
      %s391 = scalar_lea.vmem %s7, %s390
      %s392 = smul.u32 8, %s24
      %v394 = vld [vmem:[%s355] sm:$0xff]
      %v395 = vld [vmem:[%s355 + $0x8] sm:$0xff]
      %v396 = vld [vmem:[%s355 + $0x10] sm:$0xff]
      %v397 = vld [vmem:[%s355 + $0x18] sm:$0xff]
      %v398 = vld [vmem:[%s355 + $0x20] sm:$0xff]
      %v399 = vld [vmem:[%s355 + $0x28] sm:$0xff]
      %v400 = vld [vmem:[%s355 + $0x30] sm:$0xff]
      %v401 = vld [vmem:[%s355 + $0x38] sm:$0xff]
      %v402 = vld [vmem:[%s359] sm:$0x1]
      %v404 = vlaneseq
      %v405 = vshrl.u32 %v404, 7
      %v406 = vsub.s32 0, %v405
      %v407 = vrot.slane %v402, %v406
      %v409 = vmul.f32 %v394, %v407
      %v410 = vmul.f32 %v395, %v407
      %v411 = vmul.f32 %v396, %v407
      %v412 = vmul.f32 %v397, %v407
      %v413 = vmul.f32 %v398, %v407
      %v414 = vmul.f32 %v399, %v407
      %v415 = vmul.f32 %v400, %v407
      %v416 = vmul.f32 %v401, %v407
      %v417 = vld [vmem:[%s362] sm:$0x1]
      %v419 = vlaneseq
      %v420 = vshrl.u32 %v419, 7
      %v421 = vsub.s32 0, %v420
      %v422 = vrot.slane %v417, %v421
      %v424 = vadd.f32 %v409, %v422
      %v425 = vadd.f32 %v410, %v422
      %v426 = vadd.f32 %v411, %v422
      %v427 = vadd.f32 %v412, %v422
      %v428 = vadd.f32 %v413, %v422
      %v429 = vadd.f32 %v414, %v422
      %v430 = vadd.f32 %v415, %v422
      %v431 = vadd.f32 %v416, %v422
      %v432 = vpack.c.bf16 %v425, %v424
      %v433 = vpack.c.bf16 %v427, %v426
      %v434 = vpack.c.bf16 %v429, %v428
      %v435 = vpack.c.bf16 %v431, %v430
      %v436 = vld [vmem:[%s3] sm:$0xff]
      %v437 = vld [vmem:[%s3 + $0x8] sm:$0xf]
      %v438 = vld [vmem:[%s3 + $0xc] sm:$0xff]
      %v439 = vld [vmem:[%s3 + $0x14] sm:$0xf]
      %v440 = vld [vmem:[%s3 + $0x18] sm:$0xff]
      %v441 = vld [vmem:[%s3 + $0x20] sm:$0xf]
      %v442 = vld [vmem:[%s3 + $0x24] sm:$0xff]
      %v443 = vld [vmem:[%s3 + $0x2c] sm:$0xf]
      %v444 = vld [vmem:[%s3 + $0x30] sm:$0xff]
      %v445 = vld [vmem:[%s3 + $0x38] sm:$0xf]
      %v446 = vld [vmem:[%s3 + $0x3c] sm:$0xff]
      %v447 = vld [vmem:[%s3 + $0x44] sm:$0xf]
      %v448 = vld [vmem:[%s3 + $0x48] sm:$0xff]
      %v449 = vld [vmem:[%s3 + $0x50] sm:$0xf]
      %v450 = vld [vmem:[%s3 + $0x54] sm:$0xff]
      %v451 = vld [vmem:[%s3 + $0x5c] sm:$0xf]
      %v452 = vld [vmem:[%s3 + $0x60] sm:$0xff]
      %v453 = vld [vmem:[%s3 + $0x68] sm:$0xf]
      %v454 = vld [vmem:[%s3 + $0x6c] sm:$0xff]
      %v455 = vld [vmem:[%s3 + $0x74] sm:$0xf]
      %v456 = vld [vmem:[%s3 + $0x78] sm:$0xff]
      %v457 = vld [vmem:[%s3 + $0x80] sm:$0xf]
      %v458 = vld [vmem:[%s3 + $0x84] sm:$0xff]
      %v459 = vld [vmem:[%s3 + $0x8c] sm:$0xf]
      %v460 = vld [vmem:[%s3 + $0x90] sm:$0xff]
      %v461 = vld [vmem:[%s3 + $0x98] sm:$0xf]
      %v462 = vld [vmem:[%s3 + $0x9c] sm:$0xff]
      %v463 = vld [vmem:[%s3 + $0xa4] sm:$0xf]
      %v464 = vld [vmem:[%s3 + $0xa8] sm:$0xff]
      %v465 = vld [vmem:[%s3 + $0xb0] sm:$0xf]
      %v466 = vld [vmem:[%s3 + $0xb4] sm:$0xff]
      %v467 = vld [vmem:[%s3 + $0xbc] sm:$0xf]
      %v468 = vld [vmem:[%s4] sm:$0x7]
      %v470 = vlaneseq
      %v471 = vshrl.u32 %v470, 7
      %v472 = vsub.s32 0, %v471
      %v473 = vrot.slane %v468, %v472
      %v474 = vlaneseq
      %v475 = vshrl.u32 %v474, 7
      %v476 = vsub.s32 1, %v475
      %v477 = vrot.slane %v468, %v476
      %v478 = vlaneseq
      %v479 = vshrl.u32 %v478, 7
      %v480 = vsub.s32 2, %v479
      %v481 = vrot.slane %v468, %v480
      %v517 = vunpack.c.l.b16 %v436
      %v518 = vunpack.c.h.b16 %v436
      %v519 = vunpack.c.l.b16 %v437
      %v520 = vunpack.c.l.b16 %v438
      %v521 = vunpack.c.h.b16 %v438
      %v522 = vunpack.c.l.b16 %v439
      %v523 = vunpack.c.l.b16 %v440
      %v524 = vunpack.c.h.b16 %v440
      %v525 = vunpack.c.l.b16 %v441
      %v526 = vunpack.c.l.b16 %v442
      %v527 = vunpack.c.h.b16 %v442
      %v528 = vunpack.c.l.b16 %v443
      %v529 = vunpack.c.l.b16 %v444
      %v530 = vunpack.c.h.b16 %v444
      %v531 = vunpack.c.l.b16 %v445
      %v532 = vunpack.c.l.b16 %v446
      %v533 = vunpack.c.h.b16 %v446
      %v534 = vunpack.c.l.b16 %v447
      %v535 = vunpack.c.l.b16 %v448
      %v536 = vunpack.c.h.b16 %v448
      %v537 = vunpack.c.l.b16 %v449
      %v538 = vunpack.c.l.b16 %v450
      %v539 = vunpack.c.h.b16 %v450
      %v540 = vunpack.c.l.b16 %v451
      %v541 = vunpack.c.l.b16 %v452
      %v542 = vunpack.c.h.b16 %v452
      %v543 = vunpack.c.l.b16 %v453
      %v544 = vunpack.c.l.b16 %v454
      %v545 = vunpack.c.h.b16 %v454
      %v546 = vunpack.c.l.b16 %v455
      %v547 = vunpack.c.l.b16 %v456
      %v548 = vunpack.c.h.b16 %v456
      %v549 = vunpack.c.l.b16 %v457
      %v550 = vunpack.c.l.b16 %v458
      %v551 = vunpack.c.h.b16 %v458
      %v552 = vunpack.c.l.b16 %v459
      %v553 = vunpack.c.l.b16 %v460
      %v554 = vunpack.c.h.b16 %v460
      %v555 = vunpack.c.l.b16 %v461
      %v556 = vunpack.c.l.b16 %v462
      %v557 = vunpack.c.h.b16 %v462
      %v558 = vunpack.c.l.b16 %v463
      %v559 = vunpack.c.l.b16 %v464
      %v560 = vunpack.c.h.b16 %v464
      %v561 = vunpack.c.l.b16 %v465
      %v562 = vunpack.c.l.b16 %v466
      %v563 = vunpack.c.h.b16 %v466
      %v564 = vunpack.c.l.b16 %v467
      %v565 = vpack.c.b16 %v520, %v517
      %v566 = vpack.c.b16 %v521, %v518
      %v567 = vpack.c.b16 %v522, %v519
      %v568 = vpack.c.b16 %v526, %v523
      %v569 = vpack.c.b16 %v527, %v524
      %v570 = vpack.c.b16 %v528, %v525
      %v571 = vpack.c.b16 %v532, %v529
      %v572 = vpack.c.b16 %v533, %v530
      %v573 = vpack.c.b16 %v534, %v531
      %v574 = vpack.c.b16 %v538, %v535
      %v575 = vpack.c.b16 %v539, %v536
      %v576 = vpack.c.b16 %v540, %v537
      %v577 = vpack.c.b16 %v544, %v541
      %v578 = vpack.c.b16 %v545, %v542
      %v579 = vpack.c.b16 %v546, %v543
      %v580 = vpack.c.b16 %v550, %v547
      %v581 = vpack.c.b16 %v551, %v548
      %v582 = vpack.c.b16 %v552, %v549
      %v583 = vpack.c.b16 %v556, %v553
      %v584 = vpack.c.b16 %v557, %v554
      %v585 = vpack.c.b16 %v558, %v555
      %v586 = vpack.c.b16 %v562, %v559
      %v587 = vpack.c.b16 %v563, %v560
      %v588 = vpack.c.b16 %v564, %v561
      %613 = vmatprep.subr.bf16.mxu0 %v587
      %614 = vmatpush1.bf16.msra.mxu0 %v586
      %615 = vmatprep.subr.bf16.mxu0 %v584
      %616 = vmatpush1.bf16.msra.mxu0 %v583
      %617 = vmatprep.subr.bf16.mxu0 %v581
      %618 = vmatpush1.bf16.msra.mxu0 %v580
      %619 = vmatprep.subr.bf16.mxu0 %v578
      %620 = vmatpush1.bf16.msra.mxu0 %v577
      %621 = vmatprep.subr.bf16.mxu0 %v575
      %622 = vmatpush1.bf16.msra.mxu0 %v574
      %623 = vmatprep.subr.bf16.mxu0 %v572
      %624 = vmatpush1.bf16.msra.mxu0 %v571
      %625 = vmatprep.subr.bf16.mxu0 %v569
      %626 = vmatpush1.bf16.msra.mxu0 %v568
      %627 = vmatprep.subr.bf16.mxu0 %v566
      %628 = vmatpush1.bf16.msra.mxu0 %v565
      %629 = vmatprep.subr.bf16.mxu0 0
      %630 = vmatpush2.bf16.msra.mxu0 0
      %631 = vmatprep.subr.bf16.mxu0 0
      %632 = vmatpush2.bf16.msra.mxu0 0
      %633 = vmatprep.subr.bf16.mxu0 0
      %634 = vmatpush2.bf16.msra.mxu0 0
      %635 = vmatprep.subr.bf16.mxu0 0
      %636 = vmatpush2.bf16.msra.mxu0 0
      %637 = vmatprep.subr.bf16.mxu0 0
      %638 = vmatpush2.bf16.msra.mxu0 0
      %639 = vmatprep.subr.bf16.mxu0 0
      %640 = vmatpush2.bf16.msra.mxu0 0
      %641 = vmatprep.subr.bf16.mxu0 0
      %642 = vmatpush2.bf16.msra.mxu0 0
      %643 = vmatprep.subr.bf16.mxu0 0
      %644 = vmatpush2.bf16.msra.mxu0 0
      %645 = vmatprep.mubr.bf16.mxu0 0
      %646 = vmatmul.mubr.bf16.gmra.mxu0 %v432
      %v647 = vpop.f32.mrf.mxu0
      %v648 = vadd.f32 %v473, %v647
      %v649 = vpop.f32.mrf.mxu0
      %v650 = vadd.f32 %v477, %v649
      %v651 = vpop.f32.mrf.mxu0
      %v652 = vadd.f32 %v473, %v651
      %v653 = vpop.f32.mrf.mxu0
      %v654 = vadd.f32 %v477, %v653
      %655 = vmatprep.mubr.bf16.mxu0 0
      %656 = vmatmul.mubr.bf16.gmra.mxu0 %v433
      %v657 = vpop.f32.mrf.mxu0
      %v658 = vadd.f32 %v473, %v657
      %v659 = vpop.f32.mrf.mxu0
      %v660 = vadd.f32 %v477, %v659
      %v661 = vpop.f32.mrf.mxu0
      %v662 = vadd.f32 %v473, %v661
      %v663 = vpop.f32.mrf.mxu0
      %v664 = vadd.f32 %v477, %v663
      %665 = vmatprep.mubr.bf16.mxu0 0
      %666 = vmatmul.mubr.bf16.gmra.mxu0 %v434
      %v667 = vpop.f32.mrf.mxu0
      %v668 = vadd.f32 %v473, %v667
      %v669 = vpop.f32.mrf.mxu0
      %v670 = vadd.f32 %v477, %v669
      %v671 = vpop.f32.mrf.mxu0
      %v672 = vadd.f32 %v473, %v671
      %v673 = vpop.f32.mrf.mxu0
      %v674 = vadd.f32 %v477, %v673
      %675 = vmatprep.mubr.bf16.mxu0 0
      %676 = vmatmul.mubr.bf16.gmra.mxu0 %v435
      %v677 = vpop.f32.mrf.mxu0
      %v678 = vadd.f32 %v473, %v677
      %v679 = vpop.f32.mrf.mxu0
      %v680 = vadd.f32 %v477, %v679
      %v681 = vpop.f32.mrf.mxu0
      %v682 = vadd.f32 %v473, %v681
      %v683 = vpop.f32.mrf.mxu0
      %v684 = vadd.f32 %v477, %v683
      %685 = vdwg.mxu0
      %686 = vmatprep.subr.bf16.mxu0 0
      %687 = vmatpush1.bf16.msra.mxu0 %v588
      %688 = vmatprep.subr.bf16.mxu0 0
      %689 = vmatpush1.bf16.msra.mxu0 %v585
      %690 = vmatprep.subr.bf16.mxu0 0
      %691 = vmatpush1.bf16.msra.mxu0 %v582
      %692 = vmatprep.subr.bf16.mxu0 0
      %693 = vmatpush1.bf16.msra.mxu0 %v579
      %694 = vmatprep.subr.bf16.mxu0 0
      %695 = vmatpush1.bf16.msra.mxu0 %v576
      %696 = vmatprep.subr.bf16.mxu0 0
      %697 = vmatpush1.bf16.msra.mxu0 %v573
      %698 = vmatprep.subr.bf16.mxu0 0
      %699 = vmatpush1.bf16.msra.mxu0 %v570
      %700 = vmatprep.subr.bf16.mxu0 0
      %701 = vmatpush1.bf16.msra.mxu0 %v567
      %702 = vmatprep.subr.bf16.mxu0 0
      %703 = vmatpush2.bf16.msra.mxu0 0
      %704 = vmatprep.subr.bf16.mxu0 0
      %705 = vmatpush2.bf16.msra.mxu0 0
      %706 = vmatprep.subr.bf16.mxu0 0
      %707 = vmatpush2.bf16.msra.mxu0 0
      %708 = vmatprep.subr.bf16.mxu0 0
      %709 = vmatpush2.bf16.msra.mxu0 0
      %710 = vmatprep.subr.bf16.mxu0 0
      %711 = vmatpush2.bf16.msra.mxu0 0
      %712 = vmatprep.subr.bf16.mxu0 0
      %713 = vmatpush2.bf16.msra.mxu0 0
      %714 = vmatprep.subr.bf16.mxu0 0
      %715 = vmatpush2.bf16.msra.mxu0 0
      %716 = vmatprep.subr.bf16.mxu0 0
      %717 = vmatpush2.bf16.msra.mxu0 0
      %718 = vmatprep.mubr.bf16.mxu0 0
      %719 = vmatmul.mubr.bf16.gmra.mxu0 %v432
      %v720 = vpop.f32.mrf.mxu0
      %v721 = vadd.f32 %v481, %v720
      %v722 = vpop.f32.mrf.mxu0
      %v723 = vpop.f32.mrf.mxu0
      %v724 = vadd.f32 %v481, %v723
      %v725 = vpop.f32.mrf.mxu0
      %726 = vmatprep.mubr.bf16.mxu0 0
      %727 = vmatmul.mubr.bf16.gmra.mxu0 %v433
      %v728 = vpop.f32.mrf.mxu0
      %v729 = vadd.f32 %v481, %v728
      %v730 = vpop.f32.mrf.mxu0
      %v731 = vpop.f32.mrf.mxu0
      %v732 = vadd.f32 %v481, %v731
      %v733 = vpop.f32.mrf.mxu0
      %734 = vmatprep.mubr.bf16.mxu0 0
      %735 = vmatmul.mubr.bf16.gmra.mxu0 %v434
      %v736 = vpop.f32.mrf.mxu0
      %v737 = vadd.f32 %v481, %v736
      %v738 = vpop.f32.mrf.mxu0
      %v739 = vpop.f32.mrf.mxu0
      %v740 = vadd.f32 %v481, %v739
      %v741 = vpop.f32.mrf.mxu0
      %742 = vmatprep.mubr.bf16.mxu0 0
      %743 = vmatmul.mubr.bf16.gmra.mxu0 %v435
      %v744 = vpop.f32.mrf.mxu0
      %v745 = vadd.f32 %v481, %v744
      %v746 = vpop.f32.mrf.mxu0
      %v747 = vpop.f32.mrf.mxu0
      %v748 = vadd.f32 %v481, %v747
      %v749 = vpop.f32.mrf.mxu0
      %750 = vdwg.mxu0
      %v751 = vpack.c.bf16 %v652, %v648
      %v752 = vpack.c.bf16 %v662, %v658
      %v753 = vpack.c.bf16 %v672, %v668
      %v754 = vpack.c.bf16 %v682, %v678
      %v759 = vunpack.c.l.b16 %v751
      %v760 = vunpack.c.h.b16 %v751
      %v761 = vunpack.c.l.b16 %v752
      %v762 = vunpack.c.h.b16 %v752
      %v763 = vunpack.c.l.b16 %v753
      %v764 = vunpack.c.h.b16 %v753
      %v765 = vunpack.c.l.b16 %v754
      %v766 = vunpack.c.h.b16 %v754
      %v767 = vpack.c.b16 %v759, %v759
      %v768 = vpack.c.b16 %v760, %v760
      %v769 = vpack.c.b16 %v761, %v761
      %v770 = vpack.c.b16 %v762, %v762
      %v771 = vpack.c.b16 %v763, %v763
      %v772 = vpack.c.b16 %v764, %v764
      %v773 = vpack.c.b16 %v765, %v765
      %v774 = vpack.c.b16 %v766, %v766
      %783 = vst [vmem:[%s371] sm:$0xf] %v767
      %784 = vst [vmem:[%s371 + $0x4] sm:$0xf] %v768
      %785 = vst [vmem:[%s371 + $0x8] sm:$0xf] %v769
      %786 = vst [vmem:[%s371 + $0xc] sm:$0xf] %v770
      %787 = vst [vmem:[%s371 + $0x10] sm:$0xf] %v771
      %788 = vst [vmem:[%s371 + $0x14] sm:$0xf] %v772
      %789 = vst [vmem:[%s371 + $0x18] sm:$0xf] %v773
      %790 = vst [vmem:[%s371 + $0x1c] sm:$0xf] %v774
      %v791 = vpack.c.bf16 %v654, %v650
      %v792 = vpack.c.bf16 %v664, %v660
      %v793 = vpack.c.bf16 %v674, %v670
      %v794 = vpack.c.bf16 %v684, %v680
      %v799 = vunpack.c.l.b16 %v791
      %v800 = vunpack.c.h.b16 %v791
      %v801 = vunpack.c.l.b16 %v792
      %v802 = vunpack.c.h.b16 %v792
      %v803 = vunpack.c.l.b16 %v793
      %v804 = vunpack.c.h.b16 %v793
      %v805 = vunpack.c.l.b16 %v794
      %v806 = vunpack.c.h.b16 %v794
      %v807 = vpack.c.b16 %v799, %v799
      %v808 = vpack.c.b16 %v800, %v800
      %v809 = vpack.c.b16 %v801, %v801
      %v810 = vpack.c.b16 %v802, %v802
      %v811 = vpack.c.b16 %v803, %v803
      %v812 = vpack.c.b16 %v804, %v804
      %v813 = vpack.c.b16 %v805, %v805
      %v814 = vpack.c.b16 %v806, %v806
      %823 = vst [vmem:[%s381] sm:$0xf] %v807
      %824 = vst [vmem:[%s381 + $0x4] sm:$0xf] %v808
      %825 = vst [vmem:[%s381 + $0x8] sm:$0xf] %v809
      %826 = vst [vmem:[%s381 + $0xc] sm:$0xf] %v810
      %827 = vst [vmem:[%s381 + $0x10] sm:$0xf] %v811
      %828 = vst [vmem:[%s381 + $0x14] sm:$0xf] %v812
      %829 = vst [vmem:[%s381 + $0x18] sm:$0xf] %v813
      %830 = vst [vmem:[%s381 + $0x1c] sm:$0xf] %v814
      %v831 = vpack.c.bf16 %v724, %v721
      %v832 = vpack.c.bf16 %v732, %v729
      %v833 = vpack.c.bf16 %v740, %v737
      %v834 = vpack.c.bf16 %v748, %v745
      %v839 = vunpack.c.l.b16 %v831
      %v840 = vunpack.c.h.b16 %v831
      %v841 = vunpack.c.l.b16 %v832
      %v842 = vunpack.c.h.b16 %v832
      %v843 = vunpack.c.l.b16 %v833
      %v844 = vunpack.c.h.b16 %v833
      %v845 = vunpack.c.l.b16 %v834
      %v846 = vunpack.c.h.b16 %v834
      %v847 = vpack.c.b16 %v839, %v839
      %v848 = vpack.c.b16 %v840, %v840
      %v849 = vpack.c.b16 %v841, %v841
      %v850 = vpack.c.b16 %v842, %v842
      %v851 = vpack.c.b16 %v843, %v843
      %v852 = vpack.c.b16 %v844, %v844
      %v853 = vpack.c.b16 %v845, %v845
      %v854 = vpack.c.b16 %v846, %v846
      %863 = vst [vmem:[%s391] sm:$0xf] %v847
      %864 = vst [vmem:[%s391 + $0x4] sm:$0xf] %v848
      %865 = vst [vmem:[%s391 + $0x8] sm:$0xf] %v849
      %866 = vst [vmem:[%s391 + $0xc] sm:$0xf] %v850
      %867 = vst [vmem:[%s391 + $0x10] sm:$0xf] %v851
      %868 = vst [vmem:[%s391 + $0x14] sm:$0xf] %v852
      %869 = vst [vmem:[%s391 + $0x18] sm:$0xf] %v853
      %870 = vst [vmem:[%s391 + $0x1c] sm:$0xf] %v854
      %s871 = smul.u32 8, %s24
      %p872 = scmp.lt.s32.totalorder %s23, 1
      %s873 = scalar_select %p872, %s23, 1
      %p874 = scmp.lt.s32.totalorder %s871, 7
      %s875 = scalar_select %p874, %s871, 7
      %s876 = smul.addr %s873, 8
      %s877 = sadd.s32 %s875, %s876
      %s878 = smul.addr %s877, 4
      %s879 = scalar_lea.vmem %s5, %s878
      %s880 = smul.u32 8, %s24
      %p881 = scmp.lt.s32.totalorder %s23, 1
      %s882 = scalar_select %p881, %s23, 1
      %p883 = scmp.lt.s32.totalorder %s880, 7
      %s884 = scalar_select %p883, %s880, 7
      %s885 = smul.addr %s882, 8
      %s886 = sadd.s32 %s884, %s885
      %s887 = smul.addr %s886, 4
      %s888 = scalar_lea.vmem %s6, %s887
      %s889 = smul.u32 8, %s24
      %p890 = scmp.lt.s32.totalorder %s23, 1
      %s891 = scalar_select %p890, %s23, 1
      %p892 = scmp.lt.s32.totalorder %s889, 7
      %s893 = scalar_select %p892, %s889, 7
      %s894 = smul.addr %s891, 8
      %s895 = sadd.s32 %s893, %s894
      %s896 = smul.addr %s895, 4
      %s897 = scalar_lea.vmem %s7, %s896
      // Predicated region
      $region41: #{attn_block.4} parent=39 // pred_check
        %p898 = pneg %p173
      $region42: #{attn_block.4} parent=39 // pred_check_branch
        %900 = sbr.rel (%p898) target = $region44
      $region43: #{attn_block.4} parent=39 // pred_region
        %s901 = smul.u32 8, %s24
      $region44: #{attn_block.4} parent=39 // pred_fallthru
        _
      // Predicated region
      $region45: #{attn_block.4} parent=39 // pred_check
        %p902 = pneg %p201
      $region46: #{attn_block.4} parent=39 // pred_check_branch
        %904 = sbr.rel (%p902) target = $region48
      $region47: #{attn_block.4} parent=39 // pred_region
        %s905 = smul.u32 8, %s24
      $region48: #{attn_block.4} parent=39 // pred_fallthru
        _
      // Predicated region
      $region49: #{attn_block.4} parent=39 // pred_check
        %p906 = pneg %p229
      $region50: #{attn_block.4} parent=39 // pred_check_branch
        %908 = sbr.rel (%p906) target = $region52
      $region51: #{attn_block.4} parent=39 // pred_region
        %s909 = smul.u32 8, %s24
      $region52: #{attn_block.4} parent=39 // pred_fallthru
        _
    $region40: #{attn_block.4} parent=5 // pred_fallthru
      _
    %p910 = scmp.le.s32.totalorder 2, %s14
    // Predicated region
    $region53: #{attn_block.4} parent=5 // pred_check
      %p911 = pneg %p910
    $region54: #{attn_block.4} parent=5 // pred_check_branch
      %913 = sbr.rel (%p911) target = $region56
    $region55: #{attn_block.4} parent=5 // pred_region
      %s914 = ssub.s32 %s14, 2
      // Predicated region
      $region57: #{attn_block.4} parent=55 // pred_check
        %p915 = pneg %p179
      $region58: #{attn_block.4} parent=55 // pred_check_branch
        %917 = sbr.rel (%p915) target = $region60
      $region59: #{attn_block.4} parent=55 // pred_region
        %s918 = smul.u32 8, %s26
        %p919 = scmp.lt.s32.totalorder %s25, 1
        %s920 = scalar_select %p919, %s25, 1
        %p921 = scmp.lt.s32.totalorder %s918, 7
        %s922 = scalar_select %p921, %s918, 7
        %s923 = smul.addr %s920, 8
        %s924 = sadd.s32 %s922, %s923
        %s925 = smul.addr %s924, 4
        %s926 = scalar_lea.vmem %s5, %s925
      $region60: #{attn_block.4} parent=55 // pred_fallthru
        _
      // Predicated region
      $region61: #{attn_block.4} parent=55 // pred_check
        %p927 = pneg %p207
      $region62: #{attn_block.4} parent=55 // pred_check_branch
        %929 = sbr.rel (%p927) target = $region64
      $region63: #{attn_block.4} parent=55 // pred_region
        %s930 = smul.u32 8, %s26
        %p931 = scmp.lt.s32.totalorder %s25, 1
        %s932 = scalar_select %p931, %s25, 1
        %p933 = scmp.lt.s32.totalorder %s930, 7
        %s934 = scalar_select %p933, %s930, 7
        %s935 = smul.addr %s932, 8
        %s936 = sadd.s32 %s934, %s935
        %s937 = smul.addr %s936, 4
        %s938 = scalar_lea.vmem %s6, %s937
      $region64: #{attn_block.4} parent=55 // pred_fallthru
        _
      // Predicated region
      $region65: #{attn_block.4} parent=55 // pred_check
        %p939 = pneg %p235
      $region66: #{attn_block.4} parent=55 // pred_check_branch
        %941 = sbr.rel (%p939) target = $region68
      $region67: #{attn_block.4} parent=55 // pred_region
        %s942 = smul.u32 8, %s26
        %p943 = scmp.lt.s32.totalorder %s25, 1
        %s944 = scalar_select %p943, %s25, 1
        %p945 = scmp.lt.s32.totalorder %s942, 7
        %s946 = scalar_select %p945, %s942, 7
        %s947 = smul.addr %s944, 8
        %s948 = sadd.s32 %s946, %s947
        %s949 = smul.addr %s948, 4
        %s950 = scalar_lea.vmem %s7, %s949
      $region68: #{attn_block.4} parent=55 // pred_fallthru
        _
    $region56: #{attn_block.4} parent=5 // pred_fallthru
      _
  $region6: #{attn_block.4} parent=0 // loop_footer
    %s18 = sadd.s32 1, %s14
  $region7: #{attn_block.4} parent=0 // loop_footer_branch
    %13 = sbr.rel target = $region3
  $region8: #{attn_block.4} parent=0 // loop_exit
    _

// kernel: attn_block.5
$region0: #{attn_block.5}
  #allocation0 [shape = 'u32[]', space=smem, size = 0x4, offset = 0x4, fixed_abs, tag = 'smem constant byte address 0x4 - core index']
  #allocation1 [shape = 'u32[144,128]{1,0:T(1,128)}', space=vmem, size = 0x12000, scoped, tag = 'internal scratch']
  #allocation2 [shape = 'f32[64,1]{1,0:T(8,128)}', space=vmem, size = 0x8000, scoped, tag = 'scratch operand']
  #allocation3 [shape = 'f32[64,1]{1,0:T(8,128)}', space=vmem, size = 0x8000, scoped, tag = 'scratch operand']
  #allocation4 [shape = 'f32[64,128]{1,0:T(8,128)}', space=vmem, size = 0x8000, scoped, tag = 'scratch operand']
  %s0 = inlined_call_operand.vmem [shape: f32[2,64,128], index: 0, kind: input, shape index: {}, may-alias: {0,6}]
  %s1 = inlined_call_operand.vmem [shape: bf16[2,64,128], index: 1, kind: input, shape index: {}]
  %s2 = inlined_call_operand.vmem [shape: bf16[2,64,128], index: 2, kind: input, shape index: {}]
  %s3 = inlined_call_operand.vmem [shape: bf16[2,64,128], index: 3, kind: input, shape index: {}]
  %s4 = inlined_call_operand.vmem [shape: bf16[128,128], index: 4, kind: input, shape index: {}]
  %s5 = inlined_call_operand.vmem [shape: f32[1,128], index: 5, kind: input, shape index: {}]
  %s6 = inlined_call_operand.vmem [shape: f32[2,64,128], index: 6, kind: output, shape index: {}, may-alias: {0,6}]
  %s7 = sld [smem:[#allocation0]]
  $region65: #{attn_block.5} parent=0
    _
  %s9 = ssub.s32 1, %s7
  %s10 = scalar_select 0, %s9, %s7
  loop: start=0, step=1, limit=4
  $region2: #{attn_block.5} parent=0 // loop_pre_header
    _
  $region3: #{attn_block.5} parent=0 // loop_header
    %s12 = sphi 0, %s16
    %p13 = scmp.ge.s32.totalorder %s12, 4
    %s19 = sphi 0, %s38
    %s20 = sphi 0, %s34
    %s21 = sphi 0, %s30
    %s22 = sphi 0, %s19
    %s23 = sphi 0, %s20
    %s24 = sphi 0, %s21
    %s25 = sphi 0, %s22
    %s26 = sphi 0, %s23
    %s27 = sphi 0, %s24
    %s43 = sphi 0, %s45
    %s46 = sphi 0, %s43
    %s47 = sphi 0, %s46
    %s63 = sphi 0, %s47
    %s71 = sphi 0, %s73
    %s74 = sphi 0, %s71
    %s75 = sphi 0, %s74
    %s91 = sphi 0, %s75
    %s99 = sphi 0, %s101
    %s102 = sphi 0, %s99
    %s103 = sphi 0, %s102
    %s119 = sphi 0, %s103
    %s127 = sphi 0, %s129
    %s130 = sphi 0, %s127
    %s131 = sphi 0, %s130
    %s147 = sphi 0, %s131
    %s151 = sphi 0, %s151
    %s153 = sphi 0, %s151
    %s154 = sphi 0, %s153
    %s168 = sphi 0, %s154
    %s172 = sphi 0, %s172
    %s174 = sphi 0, %s172
    %s175 = sphi 0, %s174
    %s189 = sphi 0, %s175
    %s197 = sphi 0, %s199
    %s200 = sphi 0, %s197
    %s201 = sphi 0, %s200
    %s217 = sphi 0, %s201
  $region4: #{attn_block.5} parent=0 // loop_header_branch
    %15 = sbr.rel (%p13) target = $region8
  $region5: #{attn_block.5} parent=0 // loop_body
    %s17 = ssub.s32 %s12, 1
    %s18 = ssub.s32 %s12, 2
    %s28 = sadd.s32 1, %s21
    %p29 = scmp.ge.s32.totalorder %s28, 1
    %s30 = scalar_select %p29, 0, %s28
    %s31 = sadd.s32 1, %s20
    %s32 = scalar_select %p29, %s31, %s20
    %p33 = scmp.ge.s32.totalorder %s32, 1
    %s34 = scalar_select %p33, 0, %s32
    %s35 = sadd.s32 1, %s19
    %s36 = scalar_select %p33, %s35, %s19
    %p37 = scmp.ge.s32.totalorder %s36, 2
    %s38 = scalar_select %p37, 0, %s36
    %s39 = ssub.s32 %s19, %s38
    %s40 = ssub.s32 %s20, %s34
    %s41 = sor.u32 %s39, %s40
    %p42 = scmp.eq.s32.totalorder %s41, 0
    %s44 = sadd.s32 %s43, 1
    %s45 = scalar_select %p42, %s43, %s44
    %p48 = pneg %p42
    %p49 = scmp.eq.s32.totalorder %s12, 1
    %p50 = por %p48, %p49
    %p51 = scmp.ne.s32.totalorder %s43, %s46
    %p52 = scmp.eq.s32.totalorder %s12, 0
    %p53 = por %p51, %p52
    %p54 = scmp.ne.s32.totalorder %s43, %s46
    %p55 = scmp.eq.s32.totalorder %s17, 1
    %p56 = por %p54, %p55
    %p57 = scmp.ne.s32.totalorder %s46, %s47
    %p58 = scmp.eq.s32.totalorder %s17, 0
    %p59 = por %p57, %p58
    %p60 = scmp.ne.s32.totalorder %s46, %s47
    %p61 = scmp.eq.s32.totalorder %s18, 1
    %p62 = por %p60, %p61
    %p64 = scmp.ne.s32.totalorder %s47, %s63
    %p65 = scmp.eq.s32.totalorder %s18, 0
    %p66 = por %p64, %p65
    %s67 = ssub.s32 %s19, %s38
    %s68 = ssub.s32 %s20, %s34
    %s69 = sor.u32 %s67, %s68
    %p70 = scmp.eq.s32.totalorder %s69, 0
    %s72 = sadd.s32 %s71, 1
    %s73 = scalar_select %p70, %s71, %s72
    %p76 = pneg %p70
    %p77 = scmp.eq.s32.totalorder %s12, 1
    %p78 = por %p76, %p77
    %p79 = scmp.ne.s32.totalorder %s71, %s74
    %p80 = scmp.eq.s32.totalorder %s12, 0
    %p81 = por %p79, %p80
    %p82 = scmp.ne.s32.totalorder %s71, %s74
    %p83 = scmp.eq.s32.totalorder %s17, 1
    %p84 = por %p82, %p83
    %p85 = scmp.ne.s32.totalorder %s74, %s75
    %p86 = scmp.eq.s32.totalorder %s17, 0
    %p87 = por %p85, %p86
    %p88 = scmp.ne.s32.totalorder %s74, %s75
    %p89 = scmp.eq.s32.totalorder %s18, 1
    %p90 = por %p88, %p89
    %p92 = scmp.ne.s32.totalorder %s75, %s91
    %p93 = scmp.eq.s32.totalorder %s18, 0
    %p94 = por %p92, %p93
    %s95 = ssub.s32 %s19, %s38
    %s96 = ssub.s32 %s21, %s30
    %s97 = sor.u32 %s95, %s96
    %p98 = scmp.eq.s32.totalorder %s97, 0
    %s100 = sadd.s32 %s99, 1
    %s101 = scalar_select %p98, %s99, %s100
    %p104 = pneg %p98
    %p105 = scmp.eq.s32.totalorder %s12, 1
    %p106 = por %p104, %p105
    %p107 = scmp.ne.s32.totalorder %s99, %s102
    %p108 = scmp.eq.s32.totalorder %s12, 0
    %p109 = por %p107, %p108
    %p110 = scmp.ne.s32.totalorder %s99, %s102
    %p111 = scmp.eq.s32.totalorder %s17, 1
    %p112 = por %p110, %p111
    %p113 = scmp.ne.s32.totalorder %s102, %s103
    %p114 = scmp.eq.s32.totalorder %s17, 0
    %p115 = por %p113, %p114
    %p116 = scmp.ne.s32.totalorder %s102, %s103
    %p117 = scmp.eq.s32.totalorder %s18, 1
    %p118 = por %p116, %p117
    %p120 = scmp.ne.s32.totalorder %s103, %s119
    %p121 = scmp.eq.s32.totalorder %s18, 0
    %p122 = por %p120, %p121
    %s123 = ssub.s32 %s19, %s38
    %s124 = ssub.s32 %s21, %s30
    %s125 = sor.u32 %s123, %s124
    %p126 = scmp.eq.s32.totalorder %s125, 0
    %s128 = sadd.s32 %s127, 1
    %s129 = scalar_select %p126, %s127, %s128
    %p132 = pneg %p126
    %p133 = scmp.eq.s32.totalorder %s12, 1
    %p134 = por %p132, %p133
    %p135 = scmp.ne.s32.totalorder %s127, %s130
    %p136 = scmp.eq.s32.totalorder %s12, 0
    %p137 = por %p135, %p136
    %p138 = scmp.ne.s32.totalorder %s127, %s130
    %p139 = scmp.eq.s32.totalorder %s17, 1
    %p140 = por %p138, %p139
    %p141 = scmp.ne.s32.totalorder %s130, %s131
    %p142 = scmp.eq.s32.totalorder %s17, 0
    %p143 = por %p141, %p142
    %p144 = scmp.ne.s32.totalorder %s130, %s131
    %p145 = scmp.eq.s32.totalorder %s18, 1
    %p146 = por %p144, %p145
    %p148 = scmp.ne.s32.totalorder %s131, %s147
    %p149 = scmp.eq.s32.totalorder %s18, 0
    %p150 = por %p148, %p149
    %s152 = sadd.s32 %s151, 1
    %p155 = scmp.eq.s32.totalorder %s12, 1
    %p156 = scmp.ne.s32.totalorder %s151, %s153
    %p157 = scmp.eq.s32.totalorder %s12, 0
    %p158 = por %p156, %p157
    %p159 = scmp.ne.s32.totalorder %s151, %s153
    %p160 = scmp.eq.s32.totalorder %s17, 1
    %p161 = por %p159, %p160
    %p162 = scmp.ne.s32.totalorder %s153, %s154
    %p163 = scmp.eq.s32.totalorder %s17, 0
    %p164 = por %p162, %p163
    %p165 = scmp.ne.s32.totalorder %s153, %s154
    %p166 = scmp.eq.s32.totalorder %s18, 1
    %p167 = por %p165, %p166
    %p169 = scmp.ne.s32.totalorder %s154, %s168
    %p170 = scmp.eq.s32.totalorder %s18, 0
    %p171 = por %p169, %p170
    %s173 = sadd.s32 %s172, 1
    %p176 = scmp.eq.s32.totalorder %s12, 1
    %p177 = scmp.ne.s32.totalorder %s172, %s174
    %p178 = scmp.eq.s32.totalorder %s12, 0
    %p179 = por %p177, %p178
    %p180 = scmp.ne.s32.totalorder %s172, %s174
    %p181 = scmp.eq.s32.totalorder %s17, 1
    %p182 = por %p180, %p181
    %p183 = scmp.ne.s32.totalorder %s174, %s175
    %p184 = scmp.eq.s32.totalorder %s17, 0
    %p185 = por %p183, %p184
    %p186 = scmp.ne.s32.totalorder %s174, %s175
    %p187 = scmp.eq.s32.totalorder %s18, 1
    %p188 = por %p186, %p187
    %p190 = scmp.ne.s32.totalorder %s175, %s189
    %p191 = scmp.eq.s32.totalorder %s18, 0
    %p192 = por %p190, %p191
    %s193 = ssub.s32 %s19, %s38
    %s194 = ssub.s32 %s20, %s34
    %s195 = sor.u32 %s193, %s194
    %p196 = scmp.eq.s32.totalorder %s195, 0
    %s198 = sadd.s32 %s197, 1
    %s199 = scalar_select %p196, %s197, %s198
    %p202 = pneg %p196
    %p203 = scmp.eq.s32.totalorder %s12, 1
    %p204 = por %p202, %p203
    %p205 = scmp.ne.s32.totalorder %s197, %s200
    %p206 = scmp.eq.s32.totalorder %s12, 0
    %p207 = por %p205, %p206
    %p208 = scmp.ne.s32.totalorder %s197, %s200
    %p209 = scmp.eq.s32.totalorder %s17, 1
    %p210 = por %p208, %p209
    %p211 = scmp.ne.s32.totalorder %s200, %s201
    %p212 = scmp.eq.s32.totalorder %s17, 0
    %p213 = por %p211, %p212
    %p214 = scmp.ne.s32.totalorder %s200, %s201
    %p215 = scmp.eq.s32.totalorder %s18, 1
    %p216 = por %p214, %p215
    %p218 = scmp.ne.s32.totalorder %s201, %s217
    %p219 = scmp.eq.s32.totalorder %s18, 0
    %p220 = por %p218, %p219
    %p221 = scmp.le.s32.totalorder 1, %s12
    %p222 = scmp.lt.s32.totalorder %s12, 3
    %p223 = pnand %p221, %p222
    %p224 = pneg %p223
    // Predicated region
    $region9: #{attn_block.5} parent=5 // pred_check
      _
    $region10: #{attn_block.5} parent=5 // pred_check_branch
      %226 = sbr.rel (%p223) target = $region12
    $region11: #{attn_block.5} parent=5 // pred_region
      %s227 = ssub.s32 %s12, 1
      // Predicated region
      $region13: #{attn_block.5} parent=11 // pred_check
        %p228 = pneg %p164
      $region14: #{attn_block.5} parent=11 // pred_check_branch
        %230 = sbr.rel (%p228) target = $region16
      $region15: #{attn_block.5} parent=11 // pred_region
        _
      $region16: #{attn_block.5} parent=11 // pred_fallthru
        _
      // Predicated region
      $region17: #{attn_block.5} parent=11 // pred_check
        %p231 = pneg %p185
      $region18: #{attn_block.5} parent=11 // pred_check_branch
        %233 = sbr.rel (%p231) target = $region20
      $region19: #{attn_block.5} parent=11 // pred_region
        _
      $region20: #{attn_block.5} parent=11 // pred_fallthru
        _
    $region12: #{attn_block.5} parent=5 // pred_fallthru
      _
    %p234 = scmp.lt.s32.totalorder %s12, 2
    // Predicated region
    $region21: #{attn_block.5} parent=5 // pred_check
      %p235 = pneg %p234
    $region22: #{attn_block.5} parent=5 // pred_check_branch
      %237 = sbr.rel (%p235) target = $region24
    $region23: #{attn_block.5} parent=5 // pred_region
      // Predicated region
      $region25: #{attn_block.5} parent=23 // pred_check
        %p238 = pneg %p53
      $region26: #{attn_block.5} parent=23 // pred_check_branch
        %240 = sbr.rel (%p238) target = $region28
      $region27: #{attn_block.5} parent=23 // pred_region
        %s241 = smul.u32 8, %s20
        %p242 = scmp.lt.s32.totalorder %s19, 1
        %s243 = scalar_select %p242, %s19, 1
        %p244 = scmp.lt.s32.totalorder %s241, 7
        %s245 = scalar_select %p244, %s241, 7
        %s246 = smul.addr %s243, 8
        %s247 = sadd.s32 %s245, %s246
        %s248 = smul.addr %s247, 8
        %s249 = scalar_lea.vmem %s0, %s248
        %s250 = smul.u32 8, %s20
      $region28: #{attn_block.5} parent=23 // pred_fallthru
        _
      // Predicated region
      $region29: #{attn_block.5} parent=23 // pred_check
        %p251 = pneg %p81
      $region30: #{attn_block.5} parent=23 // pred_check_branch
        %253 = sbr.rel (%p251) target = $region32
      $region31: #{attn_block.5} parent=23 // pred_region
        %s254 = smul.u32 8, %s20
        %p255 = scmp.lt.s32.totalorder %s19, 1
        %s256 = scalar_select %p255, %s19, 1
        %p257 = scmp.lt.s32.totalorder %s254, 7
        %s258 = scalar_select %p257, %s254, 7
        %s259 = smul.addr %s256, 8
        %s260 = sadd.s32 %s258, %s259
        %s261 = smul.addr %s260, 4
        %s262 = scalar_lea.vmem %s1, %s261
        %s263 = smul.u32 8, %s20
      $region32: #{attn_block.5} parent=23 // pred_fallthru
        _
      // Predicated region
      $region33: #{attn_block.5} parent=23 // pred_check
        %p264 = pneg %p109
      $region34: #{attn_block.5} parent=23 // pred_check_branch
        %266 = sbr.rel (%p264) target = $region36
      $region35: #{attn_block.5} parent=23 // pred_region
        %s267 = smul.u32 8, %s21
        %p268 = scmp.lt.s32.totalorder %s19, 1
        %s269 = scalar_select %p268, %s19, 1
        %p270 = scmp.lt.s32.totalorder %s267, 7
        %s271 = scalar_select %p270, %s267, 7
        %s272 = smul.addr %s269, 8
        %s273 = sadd.s32 %s271, %s272
        %s274 = smul.addr %s273, 4
        %s275 = scalar_lea.vmem %s2, %s274
        %s276 = smul.u32 8, %s21
      $region36: #{attn_block.5} parent=23 // pred_fallthru
        _
      // Predicated region
      $region37: #{attn_block.5} parent=23 // pred_check
        %p277 = pneg %p137
      $region38: #{attn_block.5} parent=23 // pred_check_branch
        %279 = sbr.rel (%p277) target = $region40
      $region39: #{attn_block.5} parent=23 // pred_region
        %s280 = smul.u32 8, %s21
        %p281 = scmp.lt.s32.totalorder %s19, 1
        %s282 = scalar_select %p281, %s19, 1
        %p283 = scmp.lt.s32.totalorder %s280, 7
        %s284 = scalar_select %p283, %s280, 7
        %s285 = smul.addr %s282, 8
        %s286 = sadd.s32 %s284, %s285
        %s287 = smul.addr %s286, 4
        %s288 = scalar_lea.vmem %s3, %s287
        %s289 = smul.u32 8, %s21
      $region40: #{attn_block.5} parent=23 // pred_fallthru
        _
    $region24: #{attn_block.5} parent=5 // pred_fallthru
      _
    %p290 = scmp.le.s32.totalorder 1, %s12
    %p291 = scmp.lt.s32.totalorder %s12, 3
    %p292 = pnand %p290, %p291
    %p293 = pneg %p292
    // Predicated region
    $region41: #{attn_block.5} parent=5 // pred_check
      _
    $region42: #{attn_block.5} parent=5 // pred_check_branch
      %295 = sbr.rel (%p292) target = $region44
    $region43: #{attn_block.5} parent=5 // pred_region
      %s296 = ssub.s32 %s12, 1
      %s297 = smul.u32 8, %s23
      %p298 = scmp.lt.s32.totalorder %s22, 1
      %s299 = scalar_select %p298, %s22, 1
      %p300 = scmp.lt.s32.totalorder %s297, 7
      %s301 = scalar_select %p300, %s297, 7
      %s302 = smul.addr %s299, 8
      %s303 = sadd.s32 %s301, %s302
      %s304 = smul.addr %s303, 8
      %s305 = scalar_lea.vmem %s0, %s304
      %p306 = pneg %p59
      %p307 = pneg %p56
      %s308 = smul.u32 8, %s23
      %p309 = scmp.lt.s32.totalorder %s22, 1
      %s310 = scalar_select %p309, %s22, 1
      %p311 = scmp.lt.s32.totalorder %s308, 7
      %s312 = scalar_select %p311, %s308, 7
      %s313 = smul.addr %s310, 8
      %s314 = sadd.s32 %s312, %s313
      %s315 = smul.addr %s314, 4
      %s316 = scalar_lea.vmem %s1, %s315
      %p317 = pneg %p87
      %p318 = pneg %p84
      %s319 = smul.u32 8, %s24
      %p320 = scmp.lt.s32.totalorder %s22, 1
      %s321 = scalar_select %p320, %s22, 1
      %p322 = scmp.lt.s32.totalorder %s319, 7
      %s323 = scalar_select %p322, %s319, 7
      %s324 = smul.addr %s321, 8
      %s325 = sadd.s32 %s323, %s324
      %s326 = smul.addr %s325, 4
      %s327 = scalar_lea.vmem %s2, %s326
      %p328 = pneg %p115
      %p329 = pneg %p112
      %s330 = smul.u32 8, %s24
      %p331 = scmp.lt.s32.totalorder %s22, 1
      %s332 = scalar_select %p331, %s22, 1
      %p333 = scmp.lt.s32.totalorder %s330, 7
      %s334 = scalar_select %p333, %s330, 7
      %s335 = smul.addr %s332, 8
      %s336 = sadd.s32 %s334, %s335
      %s337 = smul.addr %s336, 4
      %s338 = scalar_lea.vmem %s3, %s337
      %p339 = pneg %p143
      %p340 = pneg %p140
      %p341 = pneg %p164
      %p342 = pneg %p161
      %p343 = pneg %p185
      %p344 = pneg %p182
      %p345 = pneg %p213
      %p346 = pneg %p210
      %s347 = smul.u32 8, %s23
      %p348 = scmp.lt.s32.totalorder %s22, 1
      %s349 = scalar_select %p348, %s22, 1
      %p350 = scmp.lt.s32.totalorder %s347, 7
      %s351 = scalar_select %p350, %s347, 7
      %s352 = smul.addr %s349, 8
      %s353 = sadd.s32 %s351, %s352
      %s354 = smul.addr %s353, 8
      %s355 = scalar_lea.vmem %s6, %s354
      %s356 = smul.u32 8, %s23
      %p357 = scmp.lt.s32.totalorder %s22, 1
      %s358 = scalar_select %p357, %s22, 1
      %p359 = scmp.lt.s32.totalorder %s356, 7
      %s360 = scalar_select %p359, %s356, 7
      %s361 = smul.addr %s358, 8
      %s362 = sadd.s32 %s360, %s361
      %s363 = smul.addr %s362, 8
      %s364 = scalar_lea.vmem %s0, %s363
      %s365 = smul.u32 8, %s23
      %s366 = smul.u32 8, %s23
      %p367 = scmp.lt.s32.totalorder %s22, 1
      %s368 = scalar_select %p367, %s22, 1
      %p369 = scmp.lt.s32.totalorder %s366, 7
      %s370 = scalar_select %p369, %s366, 7
      %s371 = smul.addr %s368, 8
      %s372 = sadd.s32 %s370, %s371
      %s373 = smul.addr %s372, 4
      %s374 = scalar_lea.vmem %s1, %s373
      %s375 = smul.u32 8, %s23
      %s376 = smul.u32 8, %s24
      %p377 = scmp.lt.s32.totalorder %s22, 1
      %s378 = scalar_select %p377, %s22, 1
      %p379 = scmp.lt.s32.totalorder %s376, 7
      %s380 = scalar_select %p379, %s376, 7
      %s381 = smul.addr %s378, 8
      %s382 = sadd.s32 %s380, %s381
      %s383 = smul.addr %s382, 4
      %s384 = scalar_lea.vmem %s2, %s383
      %s385 = smul.u32 8, %s24
      %s386 = smul.u32 8, %s24
      %p387 = scmp.lt.s32.totalorder %s22, 1
      %s388 = scalar_select %p387, %s22, 1
      %p389 = scmp.lt.s32.totalorder %s386, 7
      %s390 = scalar_select %p389, %s386, 7
      %s391 = smul.addr %s388, 8
      %s392 = sadd.s32 %s390, %s391
      %s393 = smul.addr %s392, 4
      %s394 = scalar_lea.vmem %s3, %s393
      %s395 = smul.u32 8, %s24
      %s396 = smul.u32 8, %s23
      %p397 = scmp.lt.s32.totalorder %s22, 1
      %s398 = scalar_select %p397, %s22, 1
      %p399 = scmp.lt.s32.totalorder %s396, 7
      %s400 = scalar_select %p399, %s396, 7
      %s401 = smul.addr %s398, 8
      %s402 = sadd.s32 %s400, %s401
      %s403 = smul.addr %s402, 8
      %s404 = scalar_lea.vmem %s6, %s403
      %s405 = smul.u32 8, %s23
      %p407 = scmp.eq.s32.totalorder %s24, 0
      // Predicated region
      $region45: #{attn_block.5} parent=43 // pred_check
        %p408 = pneg %p407
      $region46: #{attn_block.5} parent=43 // pred_check_branch
        %410 = sbr.rel (%p408) target = $region48
      $region47: #{attn_block.5} parent=43 // pred_region
        %vm411 = vcmask 7168
        %412 = vst.msk [vmem:[#allocation2] sm:$0xff] %vm411, -inf
        %413 = vst.msk [vmem:[#allocation2 + $0x8] sm:$0xff] %vm411, -inf
        %414 = vst.msk [vmem:[#allocation2 + $0x10] sm:$0xff] %vm411, -inf
        %415 = vst.msk [vmem:[#allocation2 + $0x18] sm:$0xff] %vm411, -inf
        %416 = vst.msk [vmem:[#allocation2 + $0x20] sm:$0xff] %vm411, -inf
        %417 = vst.msk [vmem:[#allocation2 + $0x28] sm:$0xff] %vm411, -inf
        %418 = vst.msk [vmem:[#allocation2 + $0x30] sm:$0xff] %vm411, -inf
        %419 = vst.msk [vmem:[#allocation2 + $0x38] sm:$0xff] %vm411, -inf
        %420 = vst.msk [vmem:[#allocation3] sm:$0xff] %vm411, 0.0
        %421 = vst.msk [vmem:[#allocation3 + $0x8] sm:$0xff] %vm411, 0.0
        %422 = vst.msk [vmem:[#allocation3 + $0x10] sm:$0xff] %vm411, 0.0
        %423 = vst.msk [vmem:[#allocation3 + $0x18] sm:$0xff] %vm411, 0.0
        %424 = vst.msk [vmem:[#allocation3 + $0x20] sm:$0xff] %vm411, 0.0
        %425 = vst.msk [vmem:[#allocation3 + $0x28] sm:$0xff] %vm411, 0.0
        %426 = vst.msk [vmem:[#allocation3 + $0x30] sm:$0xff] %vm411, 0.0
        %427 = vst.msk [vmem:[#allocation3 + $0x38] sm:$0xff] %vm411, 0.0
        %428 = vst [vmem:[#allocation4] sm:$0xff] 0.0
        %429 = vst [vmem:[#allocation4 + $0x8] sm:$0xff] 0.0
        %430 = vst [vmem:[#allocation4 + $0x10] sm:$0xff] 0.0
        %431 = vst [vmem:[#allocation4 + $0x18] sm:$0xff] 0.0
        %432 = vst [vmem:[#allocation4 + $0x20] sm:$0xff] 0.0
        %433 = vst [vmem:[#allocation4 + $0x28] sm:$0xff] 0.0
        %434 = vst [vmem:[#allocation4 + $0x30] sm:$0xff] 0.0
        %435 = vst [vmem:[#allocation4 + $0x38] sm:$0xff] 0.0
      $region48: #{attn_block.5} parent=43 // pred_fallthru
        _
      %v436 = vld [vmem:[%s374] sm:$0xf]
      %v437 = vld [vmem:[%s374 + $0x4] sm:$0xf]
      %v438 = vld [vmem:[%s374 + $0x8] sm:$0xf]
      %v439 = vld [vmem:[%s374 + $0xc] sm:$0xf]
      %v440 = vld [vmem:[%s374 + $0x10] sm:$0xf]
      %v441 = vld [vmem:[%s374 + $0x14] sm:$0xf]
      %v442 = vld [vmem:[%s374 + $0x18] sm:$0xf]
      %v443 = vld [vmem:[%s374 + $0x1c] sm:$0xf]
      %v444 = vld [vmem:[%s384] sm:$0xf]
      %v445 = vld [vmem:[%s384 + $0x4] sm:$0xf]
      %v446 = vld [vmem:[%s384 + $0x8] sm:$0xf]
      %v447 = vld [vmem:[%s384 + $0xc] sm:$0xf]
      %v448 = vld [vmem:[%s384 + $0x10] sm:$0xf]
      %v449 = vld [vmem:[%s384 + $0x14] sm:$0xf]
      %v450 = vld [vmem:[%s384 + $0x18] sm:$0xf]
      %v451 = vld [vmem:[%s384 + $0x1c] sm:$0xf]
      %v460 = vunpack.c.l.b16 %v436
      %v461 = vunpack.c.l.b16 %v437
      %v462 = vunpack.c.l.b16 %v438
      %v463 = vunpack.c.l.b16 %v439
      %v464 = vunpack.c.l.b16 %v440
      %v465 = vunpack.c.l.b16 %v441
      %v466 = vunpack.c.l.b16 %v442
      %v467 = vunpack.c.l.b16 %v443
      %v468 = vpack.c.b16 %v461, %v460
      %v469 = vpack.c.b16 %v463, %v462
      %v470 = vpack.c.b16 %v465, %v464
      %v471 = vpack.c.b16 %v467, %v466
      %v484 = vunpack.c.l.b16 %v444
      %v485 = vunpack.c.l.b16 %v445
      %v486 = vunpack.c.l.b16 %v446
      %v487 = vunpack.c.l.b16 %v447
      %v488 = vunpack.c.l.b16 %v448
      %v489 = vunpack.c.l.b16 %v449
      %v490 = vunpack.c.l.b16 %v450
      %v491 = vunpack.c.l.b16 %v451
      %v492 = vpack.c.b16 %v485, %v484
      %v493 = vpack.c.b16 %v487, %v486
      %v494 = vpack.c.b16 %v489, %v488
      %v495 = vpack.c.b16 %v491, %v490
      %500 = vmatprep.subr.bf16.mxu0 0
      %501 = vmatpush1.bf16.xpose.msra.mxu0 0
      %502 = vmatprep.subr.bf16.mxu0 0
      %503 = vmatpush1.bf16.xpose.msra.mxu0 0
      %504 = vmatprep.subr.bf16.mxu0 0
      %505 = vmatpush1.bf16.xpose.msra.mxu0 0
      %506 = vmatprep.subr.bf16.mxu0 0
      %507 = vmatpush1.bf16.xpose.msra.mxu0 0
      %508 = vmatprep.subr.bf16.mxu0 0
      %509 = vmatpush1.bf16.xpose.msra.mxu0 %v495
      %510 = vmatprep.subr.bf16.mxu0 0
      %511 = vmatpush1.bf16.xpose.msra.mxu0 %v494
      %512 = vmatprep.subr.bf16.mxu0 0
      %513 = vmatpush1.bf16.xpose.msra.mxu0 %v493
      %514 = vmatprep.subr.bf16.mxu0 0
      %515 = vmatpush1.bf16.xpose.msra.mxu0 %v492
      %516 = vmatprep.subr.bf16.mxu0 0
      %517 = vmatpush2.bf16.xpose.msra.mxu0 0
      %518 = vmatprep.subr.bf16.mxu0 0
      %519 = vmatpush2.bf16.xpose.msra.mxu0 0
      %520 = vmatprep.subr.bf16.mxu0 0
      %521 = vmatpush2.bf16.xpose.msra.mxu0 0
      %522 = vmatprep.subr.bf16.mxu0 0
      %523 = vmatpush2.bf16.xpose.msra.mxu0 0
      %524 = vmatprep.subr.bf16.mxu0 0
      %525 = vmatpush2.bf16.xpose.msra.mxu0 0
      %526 = vmatprep.subr.bf16.mxu0 0
      %527 = vmatpush2.bf16.xpose.msra.mxu0 0
      %528 = vmatprep.subr.bf16.mxu0 0
      %529 = vmatpush2.bf16.xpose.msra.mxu0 0
      %530 = vmatprep.subr.bf16.mxu0 0
      %531 = vmatpush2.bf16.xpose.msra.mxu0 0
      %532 = vmatprep.mubr.bf16.mxu0 0
      %533 = vmatmul.mubr.bf16.gmra.mxu0 %v468
      %v534 = vpop.f32.mrf.mxu0
      %v535 = vadd.f32 0.0, %v534
      %v536 = vpop.f32.mrf.mxu0
      %v537 = vpop.f32.mrf.mxu0
      %v538 = vadd.f32 0.0, %v537
      %v539 = vpop.f32.mrf.mxu0
      %540 = vmatprep.mubr.bf16.mxu0 0
      %541 = vmatmul.mubr.bf16.gmra.mxu0 %v469
      %v542 = vpop.f32.mrf.mxu0
      %v543 = vadd.f32 0.0, %v542
      %v544 = vpop.f32.mrf.mxu0
      %v545 = vpop.f32.mrf.mxu0
      %v546 = vadd.f32 0.0, %v545
      %v547 = vpop.f32.mrf.mxu0
      %548 = vmatprep.mubr.bf16.mxu0 0
      %549 = vmatmul.mubr.bf16.gmra.mxu0 %v470
      %v550 = vpop.f32.mrf.mxu0
      %v551 = vadd.f32 0.0, %v550
      %v552 = vpop.f32.mrf.mxu0
      %v553 = vpop.f32.mrf.mxu0
      %v554 = vadd.f32 0.0, %v553
      %v555 = vpop.f32.mrf.mxu0
      %556 = vmatprep.mubr.bf16.mxu0 0
      %557 = vmatmul.mubr.bf16.gmra.mxu0 %v471
      %v558 = vpop.f32.mrf.mxu0
      %v559 = vadd.f32 0.0, %v558
      %v560 = vpop.f32.mrf.mxu0
      %v561 = vpop.f32.mrf.mxu0
      %v562 = vadd.f32 0.0, %v561
      %v563 = vpop.f32.mrf.mxu0
      %564 = vdwg.mxu0
      %v565 = vld [vmem:[#allocation2] sm:$0xff]
      %v566 = vld [vmem:[#allocation2 + $0x8] sm:$0xff]
      %v567 = vld [vmem:[#allocation2 + $0x10] sm:$0xff]
      %v568 = vld [vmem:[#allocation2 + $0x18] sm:$0xff]
      %v569 = vld [vmem:[#allocation2 + $0x20] sm:$0xff]
      %v570 = vld [vmem:[#allocation2 + $0x28] sm:$0xff]
      %v571 = vld [vmem:[#allocation2 + $0x30] sm:$0xff]
      %v572 = vld [vmem:[#allocation2 + $0x38] sm:$0xff]
      %vm573 = vcmask 523264
      %v574 = vsel %vm573, %v535, -inf
      %575 = vmax.xlane.f32.xlu0 %v574
      %v576 = vpop.xlane.xlu0 %575
      %v577 = vsel %vm573, %v538, -inf
      %578 = vmax.xlane.f32.xlu0 %v577
      %v579 = vpop.xlane.xlu0 %578
      %v580 = vsel %vm573, %v543, -inf
      %581 = vmax.xlane.f32.xlu0 %v580
      %v582 = vpop.xlane.xlu0 %581
      %v583 = vsel %vm573, %v546, -inf
      %584 = vmax.xlane.f32.xlu0 %v583
      %v585 = vpop.xlane.xlu0 %584
      %v586 = vsel %vm573, %v551, -inf
      %587 = vmax.xlane.f32.xlu0 %v586
      %v588 = vpop.xlane.xlu0 %587
      %v589 = vsel %vm573, %v554, -inf
      %590 = vmax.xlane.f32.xlu0 %v589
      %v591 = vpop.xlane.xlu0 %590
      %v592 = vsel %vm573, %v559, -inf
      %593 = vmax.xlane.f32.xlu0 %v592
      %v594 = vpop.xlane.xlu0 %593
      %v595 = vsel %vm573, %v562, -inf
      %596 = vmax.xlane.f32.xlu0 %v595
      %v597 = vpop.xlane.xlu0 %596
      %v598 = vmax.f32 %v565, %v576
      %v599 = vmax.f32 %v566, %v579
      %v600 = vmax.f32 %v567, %v582
      %v601 = vmax.f32 %v568, %v585
      %v602 = vmax.f32 %v569, %v588
      %v603 = vmax.f32 %v570, %v591
      %v604 = vmax.f32 %v571, %v594
      %v605 = vmax.f32 %v572, %v597
      %v606 = vsub.f32 %v565, %v598
      %v607 = vsub.f32 %v566, %v599
      %v608 = vsub.f32 %v567, %v600
      %v609 = vsub.f32 %v568, %v601
      %v610 = vsub.f32 %v569, %v602
      %v611 = vsub.f32 %v570, %v603
      %v612 = vsub.f32 %v571, %v604
      %v613 = vsub.f32 %v572, %v605
      %v614 = vmul.f32 %v606, 1.442695
      %v615 = vpow.pop %v614
      %v616 = vmul.f32 %v607, 1.442695
      %v617 = vpow.pop %v616
      %v618 = vmul.f32 %v608, 1.442695
      %v619 = vpow.pop %v618
      %v620 = vmul.f32 %v609, 1.442695
      %v621 = vpow.pop %v620
      %v622 = vmul.f32 %v610, 1.442695
      %v623 = vpow.pop %v622
      %v624 = vmul.f32 %v611, 1.442695
      %v625 = vpow.pop %v624
      %v626 = vmul.f32 %v612, 1.442695
      %v627 = vpow.pop %v626
      %v628 = vmul.f32 %v613, 1.442695
      %v629 = vpow.pop %v628
      %631 = vset.pattern.permute.xlu0 0
      %632 = vperm.xlu0 %631, %v598
      %v633 = vpop.permute.xlu0 %632
      %636 = vset.pattern.permute.xlu0 0
      %637 = vperm.xlu0 %636, %v599
      %v638 = vpop.permute.xlu0 %637
      %641 = vset.pattern.permute.xlu0 0
      %642 = vperm.xlu0 %641, %v600
      %v643 = vpop.permute.xlu0 %642
      %646 = vset.pattern.permute.xlu0 0
      %647 = vperm.xlu0 %646, %v601
      %v648 = vpop.permute.xlu0 %647
      %651 = vset.pattern.permute.xlu0 0
      %652 = vperm.xlu0 %651, %v602
      %v653 = vpop.permute.xlu0 %652
      %656 = vset.pattern.permute.xlu0 0
      %657 = vperm.xlu0 %656, %v603
      %v658 = vpop.permute.xlu0 %657
      %661 = vset.pattern.permute.xlu0 0
      %662 = vperm.xlu0 %661, %v604
      %v663 = vpop.permute.xlu0 %662
      %666 = vset.pattern.permute.xlu0 0
      %667 = vperm.xlu0 %666, %v605
      %v668 = vpop.permute.xlu0 %667
      %v670 = vsub.f32 %v535, %v633
      %v671 = vsub.f32 %v538, %v638
      %v672 = vsub.f32 %v543, %v643
      %v673 = vsub.f32 %v546, %v648
      %v674 = vsub.f32 %v551, %v653
      %v675 = vsub.f32 %v554, %v658
      %v676 = vsub.f32 %v559, %v663
      %v677 = vsub.f32 %v562, %v668
      %v678 = vmul.f32 %v670, 1.442695
      %v679 = vpow.pop %v678
      %v680 = vmul.f32 %v671, 1.442695
      %v681 = vpow.pop %v680
      %v682 = vmul.f32 %v672, 1.442695
      %v683 = vpow.pop %v682
      %v684 = vmul.f32 %v673, 1.442695
      %v685 = vpow.pop %v684
      %v686 = vmul.f32 %v674, 1.442695
      %v687 = vpow.pop %v686
      %v688 = vmul.f32 %v675, 1.442695
      %v689 = vpow.pop %v688
      %v690 = vmul.f32 %v676, 1.442695
      %v691 = vpow.pop %v690
      %v692 = vmul.f32 %v677, 1.442695
      %v693 = vpow.pop %v692
      %v694 = vld [vmem:[#allocation3] sm:$0xff]
      %v695 = vld [vmem:[#allocation3 + $0x8] sm:$0xff]
      %v696 = vld [vmem:[#allocation3 + $0x10] sm:$0xff]
      %v697 = vld [vmem:[#allocation3 + $0x18] sm:$0xff]
      %v698 = vld [vmem:[#allocation3 + $0x20] sm:$0xff]
      %v699 = vld [vmem:[#allocation3 + $0x28] sm:$0xff]
      %v700 = vld [vmem:[#allocation3 + $0x30] sm:$0xff]
      %v701 = vld [vmem:[#allocation3 + $0x38] sm:$0xff]
      %v702 = vmul.f32 %v615, %v694
      %v703 = vmul.f32 %v617, %v695
      %v704 = vmul.f32 %v619, %v696
      %v705 = vmul.f32 %v621, %v697
      %v706 = vmul.f32 %v623, %v698
      %v707 = vmul.f32 %v625, %v699
      %v708 = vmul.f32 %v627, %v700
      %v709 = vmul.f32 %v629, %v701
      %v710 = vsel %vm573, %v679, 0.0
      %711 = vadd.xlane.f32.xlu0 %v710
      %v712 = vpop.xlane.xlu0 %711
      %v713 = vsel %vm573, %v681, 0.0
      %714 = vadd.xlane.f32.xlu0 %v713
      %v715 = vpop.xlane.xlu0 %714
      %v716 = vsel %vm573, %v683, 0.0
      %717 = vadd.xlane.f32.xlu0 %v716
      %v718 = vpop.xlane.xlu0 %717
      %v719 = vsel %vm573, %v685, 0.0
      %720 = vadd.xlane.f32.xlu0 %v719
      %v721 = vpop.xlane.xlu0 %720
      %v722 = vsel %vm573, %v687, 0.0
      %723 = vadd.xlane.f32.xlu0 %v722
      %v724 = vpop.xlane.xlu0 %723
      %v725 = vsel %vm573, %v689, 0.0
      %726 = vadd.xlane.f32.xlu0 %v725
      %v727 = vpop.xlane.xlu0 %726
      %v728 = vsel %vm573, %v691, 0.0
      %729 = vadd.xlane.f32.xlu0 %v728
      %v730 = vpop.xlane.xlu0 %729
      %v731 = vsel %vm573, %v693, 0.0
      %732 = vadd.xlane.f32.xlu0 %v731
      %v733 = vpop.xlane.xlu0 %732
      %v734 = vadd.f32 %v702, %v712
      %v735 = vadd.f32 %v703, %v715
      %v736 = vadd.f32 %v704, %v718
      %v737 = vadd.f32 %v705, %v721
      %v738 = vadd.f32 %v706, %v724
      %v739 = vadd.f32 %v707, %v727
      %v740 = vadd.f32 %v708, %v730
      %v741 = vadd.f32 %v709, %v733
      %vm742 = vcmask 7168
      %743 = vst.msk [vmem:[#allocation3] sm:$0xff] %vm742, %v734
      %744 = vst.msk [vmem:[#allocation3 + $0x8] sm:$0xff] %vm742, %v735
      %745 = vst.msk [vmem:[#allocation3 + $0x10] sm:$0xff] %vm742, %v736
      %746 = vst.msk [vmem:[#allocation3 + $0x18] sm:$0xff] %vm742, %v737
      %747 = vst.msk [vmem:[#allocation3 + $0x20] sm:$0xff] %vm742, %v738
      %748 = vst.msk [vmem:[#allocation3 + $0x28] sm:$0xff] %vm742, %v739
      %749 = vst.msk [vmem:[#allocation3 + $0x30] sm:$0xff] %vm742, %v740
      %750 = vst.msk [vmem:[#allocation3 + $0x38] sm:$0xff] %vm742, %v741
      %v751 = vld [vmem:[#allocation4] sm:$0xff]
      %v752 = vld [vmem:[#allocation4 + $0x8] sm:$0xff]
      %v753 = vld [vmem:[#allocation4 + $0x10] sm:$0xff]
      %v754 = vld [vmem:[#allocation4 + $0x18] sm:$0xff]
      %v755 = vld [vmem:[#allocation4 + $0x20] sm:$0xff]
      %v756 = vld [vmem:[#allocation4 + $0x28] sm:$0xff]
      %v757 = vld [vmem:[#allocation4 + $0x30] sm:$0xff]
      %v758 = vld [vmem:[#allocation4 + $0x38] sm:$0xff]
      %760 = vset.pattern.permute.xlu0 0
      %761 = vperm.xlu0 %760, %v615
      %v762 = vpop.permute.xlu0 %761
      %765 = vset.pattern.permute.xlu0 0
      %766 = vperm.xlu0 %765, %v617
      %v767 = vpop.permute.xlu0 %766
      %770 = vset.pattern.permute.xlu0 0
      %771 = vperm.xlu0 %770, %v619
      %v772 = vpop.permute.xlu0 %771
      %775 = vset.pattern.permute.xlu0 0
      %776 = vperm.xlu0 %775, %v621
      %v777 = vpop.permute.xlu0 %776
      %780 = vset.pattern.permute.xlu0 0
      %781 = vperm.xlu0 %780, %v623
      %v782 = vpop.permute.xlu0 %781
      %785 = vset.pattern.permute.xlu0 0
      %786 = vperm.xlu0 %785, %v625
      %v787 = vpop.permute.xlu0 %786
      %790 = vset.pattern.permute.xlu0 0
      %791 = vperm.xlu0 %790, %v627
      %v792 = vpop.permute.xlu0 %791
      %795 = vset.pattern.permute.xlu0 0
      %796 = vperm.xlu0 %795, %v629
      %v797 = vpop.permute.xlu0 %796
      %v799 = vmul.f32 %v762, %v751
      %v800 = vmul.f32 %v767, %v752
      %v801 = vmul.f32 %v772, %v753
      %v802 = vmul.f32 %v777, %v754
      %v803 = vmul.f32 %v782, %v755
      %v804 = vmul.f32 %v787, %v756
      %v805 = vmul.f32 %v792, %v757
      %v806 = vmul.f32 %v797, %v758
      %v807 = vpack.c.bf16 %v681, %v679
      %v808 = vpack.c.bf16 %v685, %v683
      %v809 = vpack.c.bf16 %v689, %v687
      %v810 = vpack.c.bf16 %v693, %v691
      %v811 = vld [vmem:[%s394] sm:$0xf]
      %v812 = vld [vmem:[%s394 + $0x4] sm:$0xf]
      %v813 = vld [vmem:[%s394 + $0x8] sm:$0xf]
      %v814 = vld [vmem:[%s394 + $0xc] sm:$0xf]
      %v815 = vld [vmem:[%s394 + $0x10] sm:$0xf]
      %v816 = vld [vmem:[%s394 + $0x14] sm:$0xf]
      %v817 = vld [vmem:[%s394 + $0x18] sm:$0xf]
      %v818 = vld [vmem:[%s394 + $0x1c] sm:$0xf]
      %v827 = vunpack.c.l.b16 %v811
      %v828 = vunpack.c.l.b16 %v812
      %v829 = vunpack.c.l.b16 %v813
      %v830 = vunpack.c.l.b16 %v814
      %v831 = vunpack.c.l.b16 %v815
      %v832 = vunpack.c.l.b16 %v816
      %v833 = vunpack.c.l.b16 %v817
      %v834 = vunpack.c.l.b16 %v818
      %v835 = vpack.c.b16 %v828, %v827
      %v836 = vpack.c.b16 %v830, %v829
      %v837 = vpack.c.b16 %v832, %v831
      %v838 = vpack.c.b16 %v834, %v833
      %v844 = vsel %vm573, %v807, 0
      %v847 = vsel %vm573, %v808, 0
      %v850 = vsel %vm573, %v809, 0
      %v853 = vsel %vm573, %v810, 0
      %855 = vmatprep.subr.bf16.mxu0 0
      %856 = vmatpush1.bf16.msra.mxu0 0
      %857 = vmatprep.subr.bf16.mxu0 0
      %858 = vmatpush1.bf16.msra.mxu0 0
      %859 = vmatprep.subr.bf16.mxu0 0
      %860 = vmatpush1.bf16.msra.mxu0 0
      %861 = vmatprep.subr.bf16.mxu0 0
      %862 = vmatpush1.bf16.msra.mxu0 0
      %863 = vmatprep.subr.bf16.mxu0 0
      %864 = vmatpush1.bf16.msra.mxu0 %v838
      %865 = vmatprep.subr.bf16.mxu0 0
      %866 = vmatpush1.bf16.msra.mxu0 %v837
      %867 = vmatprep.subr.bf16.mxu0 0
      %868 = vmatpush1.bf16.msra.mxu0 %v836
      %869 = vmatprep.subr.bf16.mxu0 0
      %870 = vmatpush1.bf16.msra.mxu0 %v835
      %871 = vmatprep.subr.bf16.mxu0 0
      %872 = vmatpush2.bf16.msra.mxu0 0
      %873 = vmatprep.subr.bf16.mxu0 0
      %874 = vmatpush2.bf16.msra.mxu0 0
      %875 = vmatprep.subr.bf16.mxu0 0
      %876 = vmatpush2.bf16.msra.mxu0 0
      %877 = vmatprep.subr.bf16.mxu0 0
      %878 = vmatpush2.bf16.msra.mxu0 0
      %879 = vmatprep.subr.bf16.mxu0 0
      %880 = vmatpush2.bf16.msra.mxu0 0
      %881 = vmatprep.subr.bf16.mxu0 0
      %882 = vmatpush2.bf16.msra.mxu0 0
      %883 = vmatprep.subr.bf16.mxu0 0
      %884 = vmatpush2.bf16.msra.mxu0 0
      %885 = vmatprep.subr.bf16.mxu0 0
      %886 = vmatpush2.bf16.msra.mxu0 0
      %887 = vmatprep.mubr.bf16.mxu0 0
      %888 = vmatmul.mubr.bf16.gmra.mxu0 %v844
      %v889 = vpop.f32.mrf.mxu0
      %v890 = vadd.f32 0.0, %v889
      %v891 = vpop.f32.mrf.mxu0
      %v892 = vpop.f32.mrf.mxu0
      %v893 = vadd.f32 0.0, %v892
      %v894 = vpop.f32.mrf.mxu0
      %895 = vmatprep.mubr.bf16.mxu0 0
      %896 = vmatmul.mubr.bf16.gmra.mxu0 %v847
      %v897 = vpop.f32.mrf.mxu0
      %v898 = vadd.f32 0.0, %v897
      %v899 = vpop.f32.mrf.mxu0
      %v900 = vpop.f32.mrf.mxu0
      %v901 = vadd.f32 0.0, %v900
      %v902 = vpop.f32.mrf.mxu0
      %903 = vmatprep.mubr.bf16.mxu0 0
      %904 = vmatmul.mubr.bf16.gmra.mxu0 %v850
      %v905 = vpop.f32.mrf.mxu0
      %v906 = vadd.f32 0.0, %v905
      %v907 = vpop.f32.mrf.mxu0
      %v908 = vpop.f32.mrf.mxu0
      %v909 = vadd.f32 0.0, %v908
      %v910 = vpop.f32.mrf.mxu0
      %911 = vmatprep.mubr.bf16.mxu0 0
      %912 = vmatmul.mubr.bf16.gmra.mxu0 %v853
      %v913 = vpop.f32.mrf.mxu0
      %v914 = vadd.f32 0.0, %v913
      %v915 = vpop.f32.mrf.mxu0
      %v916 = vpop.f32.mrf.mxu0
      %v917 = vadd.f32 0.0, %v916
      %v918 = vpop.f32.mrf.mxu0
      %919 = vdwg.mxu0
      %v920 = vadd.f32 %v799, %v890
      %v921 = vadd.f32 %v800, %v893
      %v922 = vadd.f32 %v801, %v898
      %v923 = vadd.f32 %v802, %v901
      %v924 = vadd.f32 %v803, %v906
      %v925 = vadd.f32 %v804, %v909
      %v926 = vadd.f32 %v805, %v914
      %v927 = vadd.f32 %v806, %v917
      %928 = vst [vmem:[#allocation4] sm:$0xff] %v920
      %929 = vst [vmem:[#allocation4 + $0x8] sm:$0xff] %v921
      %930 = vst [vmem:[#allocation4 + $0x10] sm:$0xff] %v922
      %931 = vst [vmem:[#allocation4 + $0x18] sm:$0xff] %v923
      %932 = vst [vmem:[#allocation4 + $0x20] sm:$0xff] %v924
      %933 = vst [vmem:[#allocation4 + $0x28] sm:$0xff] %v925
      %934 = vst [vmem:[#allocation4 + $0x30] sm:$0xff] %v926
      %935 = vst [vmem:[#allocation4 + $0x38] sm:$0xff] %v927
      %936 = vst.msk [vmem:[#allocation2] sm:$0xff] %vm742, %v598
      %937 = vst.msk [vmem:[#allocation2 + $0x8] sm:$0xff] %vm742, %v599
      %938 = vst.msk [vmem:[#allocation2 + $0x10] sm:$0xff] %vm742, %v600
      %939 = vst.msk [vmem:[#allocation2 + $0x18] sm:$0xff] %vm742, %v601
      %940 = vst.msk [vmem:[#allocation2 + $0x20] sm:$0xff] %vm742, %v602
      %941 = vst.msk [vmem:[#allocation2 + $0x28] sm:$0xff] %vm742, %v603
      %942 = vst.msk [vmem:[#allocation2 + $0x30] sm:$0xff] %vm742, %v604
      %943 = vst.msk [vmem:[#allocation2 + $0x38] sm:$0xff] %vm742, %v605
      // Predicated region
      $region49: #{attn_block.5} parent=43 // pred_check
        %p944 = pneg %p407
      $region50: #{attn_block.5} parent=43 // pred_check_branch
        %946 = sbr.rel (%p944) target = $region52
      $region51: #{attn_block.5} parent=43 // pred_region
        %v947 = vld [vmem:[#allocation4] sm:$0xff]
        %v948 = vld [vmem:[#allocation4 + $0x8] sm:$0xff]
        %v949 = vld [vmem:[#allocation4 + $0x10] sm:$0xff]
        %v950 = vld [vmem:[#allocation4 + $0x18] sm:$0xff]
        %v951 = vld [vmem:[#allocation4 + $0x20] sm:$0xff]
        %v952 = vld [vmem:[#allocation4 + $0x28] sm:$0xff]
        %v953 = vld [vmem:[#allocation4 + $0x30] sm:$0xff]
        %v954 = vld [vmem:[#allocation4 + $0x38] sm:$0xff]
        %v955 = vld [vmem:[#allocation3] sm:$0xff]
        %v956 = vld [vmem:[#allocation3 + $0x8] sm:$0xff]
        %v957 = vld [vmem:[#allocation3 + $0x10] sm:$0xff]
        %v958 = vld [vmem:[#allocation3 + $0x18] sm:$0xff]
        %v959 = vld [vmem:[#allocation3 + $0x20] sm:$0xff]
        %v960 = vld [vmem:[#allocation3 + $0x28] sm:$0xff]
        %v961 = vld [vmem:[#allocation3 + $0x30] sm:$0xff]
        %v962 = vld [vmem:[#allocation3 + $0x38] sm:$0xff]
        %v963 = vrcp.pop %v955
        %v964 = vrcp.pop %v956
        %v965 = vrcp.pop %v957
        %v966 = vrcp.pop %v958
        %v967 = vrcp.pop %v959
        %v968 = vrcp.pop %v960
        %v969 = vrcp.pop %v961
        %v970 = vrcp.pop %v962
        %972 = vset.pattern.permute.xlu0 0
        %973 = vperm.xlu0 %972, %v963
        %v974 = vpop.permute.xlu0 %973
        %977 = vset.pattern.permute.xlu0 0
        %978 = vperm.xlu0 %977, %v964
        %v979 = vpop.permute.xlu0 %978
        %982 = vset.pattern.permute.xlu0 0
        %983 = vperm.xlu0 %982, %v965
        %v984 = vpop.permute.xlu0 %983
        %987 = vset.pattern.permute.xlu0 0
        %988 = vperm.xlu0 %987, %v966
        %v989 = vpop.permute.xlu0 %988
        %992 = vset.pattern.permute.xlu0 0
        %993 = vperm.xlu0 %992, %v967
        %v994 = vpop.permute.xlu0 %993
        %997 = vset.pattern.permute.xlu0 0
        %998 = vperm.xlu0 %997, %v968
        %v999 = vpop.permute.xlu0 %998
        %1002 = vset.pattern.permute.xlu0 0
        %1003 = vperm.xlu0 %1002, %v969
        %v1004 = vpop.permute.xlu0 %1003
        %1007 = vset.pattern.permute.xlu0 0
        %1008 = vperm.xlu0 %1007, %v970
        %v1009 = vpop.permute.xlu0 %1008
        %v1011 = vmul.f32 %v947, %v974
        %v1012 = vmul.f32 %v948, %v979
        %v1013 = vmul.f32 %v949, %v984
        %v1014 = vmul.f32 %v950, %v989
        %v1015 = vmul.f32 %v951, %v994
        %v1016 = vmul.f32 %v952, %v999
        %v1017 = vmul.f32 %v953, %v1004
        %v1018 = vmul.f32 %v954, %v1009
        %v1019 = vpack.c.bf16 %v1012, %v1011
        %v1020 = vpack.c.bf16 %v1014, %v1013
        %v1021 = vpack.c.bf16 %v1016, %v1015
        %v1022 = vpack.c.bf16 %v1018, %v1017
        %v1023 = vld [vmem:[%s4] sm:$0xf]
        %v1024 = vld [vmem:[%s4 + $0x4] sm:$0xf]
        %v1025 = vld [vmem:[%s4 + $0x8] sm:$0xf]
        %v1026 = vld [vmem:[%s4 + $0xc] sm:$0xf]
        %v1027 = vld [vmem:[%s4 + $0x10] sm:$0xf]
        %v1028 = vld [vmem:[%s4 + $0x14] sm:$0xf]
        %v1029 = vld [vmem:[%s4 + $0x18] sm:$0xf]
        %v1030 = vld [vmem:[%s4 + $0x1c] sm:$0xf]
        %v1031 = vld [vmem:[%s4 + $0x20] sm:$0xf]
        %v1032 = vld [vmem:[%s4 + $0x24] sm:$0xf]
        %v1033 = vld [vmem:[%s4 + $0x28] sm:$0xf]
        %v1034 = vld [vmem:[%s4 + $0x2c] sm:$0xf]
        %v1035 = vld [vmem:[%s4 + $0x30] sm:$0xf]
        %v1036 = vld [vmem:[%s4 + $0x34] sm:$0xf]
        %v1037 = vld [vmem:[%s4 + $0x38] sm:$0xf]
        %v1038 = vld [vmem:[%s4 + $0x3c] sm:$0xf]
        %v1039 = vld [vmem:[%s5] sm:$0x1]
        %v1041 = vlaneseq
        %v1042 = vshrl.u32 %v1041, 7
        %v1043 = vsub.s32 0, %v1042
        %v1044 = vrot.slane %v1039, %v1043
        %v1062 = vunpack.c.l.b16 %v1023
        %v1063 = vunpack.c.l.b16 %v1024
        %v1064 = vunpack.c.l.b16 %v1025
        %v1065 = vunpack.c.l.b16 %v1026
        %v1066 = vunpack.c.l.b16 %v1027
        %v1067 = vunpack.c.l.b16 %v1028
        %v1068 = vunpack.c.l.b16 %v1029
        %v1069 = vunpack.c.l.b16 %v1030
        %v1070 = vunpack.c.l.b16 %v1031
        %v1071 = vunpack.c.l.b16 %v1032
        %v1072 = vunpack.c.l.b16 %v1033
        %v1073 = vunpack.c.l.b16 %v1034
        %v1074 = vunpack.c.l.b16 %v1035
        %v1075 = vunpack.c.l.b16 %v1036
        %v1076 = vunpack.c.l.b16 %v1037
        %v1077 = vunpack.c.l.b16 %v1038
        %v1078 = vpack.c.b16 %v1063, %v1062
        %v1079 = vpack.c.b16 %v1065, %v1064
        %v1080 = vpack.c.b16 %v1067, %v1066
        %v1081 = vpack.c.b16 %v1069, %v1068
        %v1082 = vpack.c.b16 %v1071, %v1070
        %v1083 = vpack.c.b16 %v1073, %v1072
        %v1084 = vpack.c.b16 %v1075, %v1074
        %v1085 = vpack.c.b16 %v1077, %v1076
        %1094 = vmatprep.subr.bf16.mxu0 0
        %1095 = vmatpush1.bf16.msra.mxu0 %v1085
        %1096 = vmatprep.subr.bf16.mxu0 0
        %1097 = vmatpush1.bf16.msra.mxu0 %v1084
        %1098 = vmatprep.subr.bf16.mxu0 0
        %1099 = vmatpush1.bf16.msra.mxu0 %v1083
        %1100 = vmatprep.subr.bf16.mxu0 0
        %1101 = vmatpush1.bf16.msra.mxu0 %v1082
        %1102 = vmatprep.subr.bf16.mxu0 0
        %1103 = vmatpush1.bf16.msra.mxu0 %v1081
        %1104 = vmatprep.subr.bf16.mxu0 0
        %1105 = vmatpush1.bf16.msra.mxu0 %v1080
        %1106 = vmatprep.subr.bf16.mxu0 0
        %1107 = vmatpush1.bf16.msra.mxu0 %v1079
        %1108 = vmatprep.subr.bf16.mxu0 0
        %1109 = vmatpush1.bf16.msra.mxu0 %v1078
        %1110 = vmatprep.subr.bf16.mxu0 0
        %1111 = vmatpush2.bf16.msra.mxu0 0
        %1112 = vmatprep.subr.bf16.mxu0 0
        %1113 = vmatpush2.bf16.msra.mxu0 0
        %1114 = vmatprep.subr.bf16.mxu0 0
        %1115 = vmatpush2.bf16.msra.mxu0 0
        %1116 = vmatprep.subr.bf16.mxu0 0
        %1117 = vmatpush2.bf16.msra.mxu0 0
        %1118 = vmatprep.subr.bf16.mxu0 0
        %1119 = vmatpush2.bf16.msra.mxu0 0
        %1120 = vmatprep.subr.bf16.mxu0 0
        %1121 = vmatpush2.bf16.msra.mxu0 0
        %1122 = vmatprep.subr.bf16.mxu0 0
        %1123 = vmatpush2.bf16.msra.mxu0 0
        %1124 = vmatprep.subr.bf16.mxu0 0
        %1125 = vmatpush2.bf16.msra.mxu0 0
        %1126 = vmatprep.mubr.bf16.mxu0 0
        %1127 = vmatmul.mubr.bf16.gmra.mxu0 %v1019
        %v1128 = vpop.f32.mrf.mxu0
        %v1129 = vadd.f32 %v1044, %v1128
        %v1130 = vpop.f32.mrf.mxu0
        %v1131 = vpop.f32.mrf.mxu0
        %v1132 = vadd.f32 %v1044, %v1131
        %v1133 = vpop.f32.mrf.mxu0
        %1134 = vmatprep.mubr.bf16.mxu0 0
        %1135 = vmatmul.mubr.bf16.gmra.mxu0 %v1020
        %v1136 = vpop.f32.mrf.mxu0
        %v1137 = vadd.f32 %v1044, %v1136
        %v1138 = vpop.f32.mrf.mxu0
        %v1139 = vpop.f32.mrf.mxu0
        %v1140 = vadd.f32 %v1044, %v1139
        %v1141 = vpop.f32.mrf.mxu0
        %1142 = vmatprep.mubr.bf16.mxu0 0
        %1143 = vmatmul.mubr.bf16.gmra.mxu0 %v1021
        %v1144 = vpop.f32.mrf.mxu0
        %v1145 = vadd.f32 %v1044, %v1144
        %v1146 = vpop.f32.mrf.mxu0
        %v1147 = vpop.f32.mrf.mxu0
        %v1148 = vadd.f32 %v1044, %v1147
        %v1149 = vpop.f32.mrf.mxu0
        %1150 = vmatprep.mubr.bf16.mxu0 0
        %1151 = vmatmul.mubr.bf16.gmra.mxu0 %v1022
        %v1152 = vpop.f32.mrf.mxu0
        %v1153 = vadd.f32 %v1044, %v1152
        %v1154 = vpop.f32.mrf.mxu0
        %v1155 = vpop.f32.mrf.mxu0
        %v1156 = vadd.f32 %v1044, %v1155
        %v1157 = vpop.f32.mrf.mxu0
        %1158 = vdwg.mxu0
        %v1159 = vld [vmem:[%s364] sm:$0xff]
        %v1160 = vld [vmem:[%s364 + $0x8] sm:$0xff]
        %v1161 = vld [vmem:[%s364 + $0x10] sm:$0xff]
        %v1162 = vld [vmem:[%s364 + $0x18] sm:$0xff]
        %v1163 = vld [vmem:[%s364 + $0x20] sm:$0xff]
        %v1164 = vld [vmem:[%s364 + $0x28] sm:$0xff]
        %v1165 = vld [vmem:[%s364 + $0x30] sm:$0xff]
        %v1166 = vld [vmem:[%s364 + $0x38] sm:$0xff]
        %v1167 = vadd.f32 %v1159, %v1129
        %v1168 = vadd.f32 %v1160, %v1132
        %v1169 = vadd.f32 %v1161, %v1137
        %v1170 = vadd.f32 %v1162, %v1140
        %v1171 = vadd.f32 %v1163, %v1145
        %v1172 = vadd.f32 %v1164, %v1148
        %v1173 = vadd.f32 %v1165, %v1153
        %v1174 = vadd.f32 %v1166, %v1156
        %1175 = vst [vmem:[%s404] sm:$0xff] %v1167
        %1176 = vst [vmem:[%s404 + $0x8] sm:$0xff] %v1168
        %1177 = vst [vmem:[%s404 + $0x10] sm:$0xff] %v1169
        %1178 = vst [vmem:[%s404 + $0x18] sm:$0xff] %v1170
        %1179 = vst [vmem:[%s404 + $0x20] sm:$0xff] %v1171
        %1180 = vst [vmem:[%s404 + $0x28] sm:$0xff] %v1172
        %1181 = vst [vmem:[%s404 + $0x30] sm:$0xff] %v1173
        %1182 = vst [vmem:[%s404 + $0x38] sm:$0xff] %v1174
      $region52: #{attn_block.5} parent=43 // pred_fallthru
        _
      %s1183 = smul.u32 8, %s23
      %p1184 = scmp.lt.s32.totalorder %s22, 1
      %s1185 = scalar_select %p1184, %s22, 1
      %p1186 = scmp.lt.s32.totalorder %s1183, 7
      %s1187 = scalar_select %p1186, %s1183, 7
      %s1188 = smul.addr %s1185, 8
      %s1189 = sadd.s32 %s1187, %s1188
      %s1190 = smul.addr %s1189, 8
      %s1191 = scalar_lea.vmem %s6, %s1190
      // Predicated region
      $region53: #{attn_block.5} parent=43 // pred_check
        %p1192 = pneg %p210
      $region54: #{attn_block.5} parent=43 // pred_check_branch
        %1194 = sbr.rel (%p1192) target = $region56
      $region55: #{attn_block.5} parent=43 // pred_region
        %s1195 = smul.u32 8, %s23
      $region56: #{attn_block.5} parent=43 // pred_fallthru
        _
    $region44: #{attn_block.5} parent=5 // pred_fallthru
      _
    %p1196 = scmp.le.s32.totalorder 2, %s12
    // Predicated region
    $region57: #{attn_block.5} parent=5 // pred_check
      %p1197 = pneg %p1196
    $region58: #{attn_block.5} parent=5 // pred_check_branch
      %1199 = sbr.rel (%p1197) target = $region60
    $region59: #{attn_block.5} parent=5 // pred_region
      %s1200 = ssub.s32 %s12, 2
      // Predicated region
      $region61: #{attn_block.5} parent=59 // pred_check
        %p1201 = pneg %p216
      $region62: #{attn_block.5} parent=59 // pred_check_branch
        %1203 = sbr.rel (%p1201) target = $region64
      $region63: #{attn_block.5} parent=59 // pred_region
        %s1204 = smul.u32 8, %s26
        %p1205 = scmp.lt.s32.totalorder %s25, 1
        %s1206 = scalar_select %p1205, %s25, 1
        %p1207 = scmp.lt.s32.totalorder %s1204, 7
        %s1208 = scalar_select %p1207, %s1204, 7
        %s1209 = smul.addr %s1206, 8
        %s1210 = sadd.s32 %s1208, %s1209
        %s1211 = smul.addr %s1210, 8
        %s1212 = scalar_lea.vmem %s6, %s1211
      $region64: #{attn_block.5} parent=59 // pred_fallthru
        _
    $region60: #{attn_block.5} parent=5 // pred_fallthru
      _
  $region6: #{attn_block.5} parent=0 // loop_footer
    %s16 = sadd.s32 1, %s12
  $region7: #{attn_block.5} parent=0 // loop_footer_branch
    %11 = sbr.rel target = $region3
  $region8: #{attn_block.5} parent=0 // loop_exit
    _

</llo_original>
